<compile_context>
chip_gen: v7x
topology: tpu7x:2x2x1
jax: 0.10.0
libtpu: 0.0.40
codegen_flags: <defaults>
</compile_context>

<pallas_src>
import jax
import jax.numpy as jnp
from jax.experimental import pallas as pl
from jax.experimental.pallas import tpu as pltpu


def _round_up(n, m):
    return pl.cdiv(n, m) * m


def policy_kernel(x_ref, w1_ref, b1_ref, w2_ref, b2_ref, o_ref):
    # Linear 1 + ReLU.  Operands fed to the MXU in the weights' dtype (f32, or
    # bf16 when params were prepared as bf16 for v6e/v7x); accumulation in f32.
    # Precision.HIGHEST keeps the f32 path exact (no-op for bf16 operands).
    x = x_ref[...].astype(w1_ref.dtype)
    h = jnp.dot(x, w1_ref[...],
                preferred_element_type=jnp.float32,
                precision=jax.lax.Precision.HIGHEST)
    h = jnp.maximum(h + b1_ref[...], 0.0)            # (TM, Hp) + (1, Hp), f32

    # Linear 2 (logits).  Hidden channels padded in prepare_params are exactly
    # zero (zero w1 cols, zero b1, zero w2 rows) so they contribute nothing.
    logits = jnp.dot(h.astype(w2_ref.dtype), w2_ref[...],
                     preferred_element_type=jnp.float32,
                     precision=jax.lax.Precision.HIGHEST)
    logits = logits + b2_ref[...]                    # (TM, O) + (1, O)

    # Numerically stable, exact softmax over the last axis (dim=1 of the input).
    m = jnp.max(logits, axis=-1, keepdims=True)
    e = jnp.exp(logits - m)
    denom = jnp.sum(e, axis=-1, keepdims=True)
    o_ref[...] = (e / denom).astype(o_ref.dtype)


def prepare_params(w1, b1, w2, b2, *, param_dtype=jnp.float32, h_pad_to=128):
    """One-time parameter preprocessing (hoisted out of the per-call path).

    Expects x@W layout: w1 (in_dim, h), b1 (h,)/(1,h), w2 (h, out), b2 (out,)/(1,out).
    Zero-pads the hidden dim to a multiple of `h_pad_to` (mathematically exact:
    ReLU(0+0)=0 and zero w2 rows contribute nothing) and casts weights to
    `param_dtype` (use jnp.bfloat16 on v6e/v7x).  Biases stay f32.
    """
    b1 = jnp.asarray(b1, jnp.float32).reshape(1, -1)
    b2 = jnp.asarray(b2, jnp.float32).reshape(1, -1)
    h = w1.shape[1]
    hp = _round_up(h, h_pad_to)
    if hp != h:
        w1 = jnp.pad(w1, ((0, 0), (0, hp - h)))
        b1 = jnp.pad(b1, ((0, 0), (0, hp - h)))
        w2 = jnp.pad(w2, ((0, hp - h), (0, 0)))
    return (jnp.asarray(w1, param_dtype), b1, jnp.asarray(w2, param_dtype), b2)


def policy_forward(x, w1, b1, w2, b2, *, tm=512):
    """x: (B, in_dim); params from prepare_params.  Returns (B, out_dim) probs."""
    B, in_dim = x.shape
    h_dim = w1.shape[1]
    out_dim = w2.shape[1]

    # Batch tile: multiple of 8 (f32 sublane); collapses to one grid step for small B.
    tm_eff = min(_round_up(tm, 8), _round_up(B, 8))
    b_pad = _round_up(B, tm_eff)
    padded = b_pad != B
    if padded:
        # TODO(synk): for a production hot path, pick tm dividing B (or mask the
        # last tile) so this HBM->HBM pad copy never runs.
        x = jnp.pad(x, ((0, b_pad - B), (0, 0)))

    grid = (b_pad // tm_eff,)

    cost = pl.CostEstimate(
        flops=2 * b_pad * (in_dim * h_dim + h_dim * out_dim),
        transcendentals=b_pad * out_dim,
        bytes_accessed=(x.size * x.dtype.itemsize
                        + (w1.size + w2.size) * w1.dtype.itemsize
                        + (b1.size + b2.size) * 4
                        + b_pad * out_dim * 4),
    )

    out = pl.pallas_call(
        policy_kernel,
        out_shape=jax.ShapeDtypeStruct((b_pad, out_dim), jnp.float32),
        grid_spec=pltpu.PrefetchScalarGridSpec(
            num_scalar_prefetch=0,
            grid=grid,
            in_specs=[
                # x tile streamed per grid step (double-buffered by the pipeline)
                pl.BlockSpec((tm_eff, in_dim), lambda i: (i, 0)),
                # weights / biases: constant block index -> VMEM-resident,
                # fetched once (tiny; double-buffer hygiene not worth the risk here)
                pl.BlockSpec((in_dim, h_dim), lambda i: (0, 0)),
                pl.BlockSpec((1, h_dim), lambda i: (0, 0)),
                pl.BlockSpec((h_dim, out_dim), lambda i: (0, 0)),
                pl.BlockSpec((1, out_dim), lambda i: (0, 0)),
            ],
            # Unpadded out_dim (== full array last dim): narrow masked store,
            # 16x less writeback than a 128-lane padded slab, and no wrapper slice.
            out_specs=pl.BlockSpec((tm_eff, out_dim), lambda i: (i, 0)),
        ),
        compiler_params=pltpu.CompilerParams(
            dimension_semantics=("parallel",)),   # shards batch tiles on v7x's 2 TCs
        cost_estimate=cost,
    )(x, w1, b1, w2, b2)

    return out[:B] if padded else out


if __name__ == "__main__":
    # Small shapes implied by the MLP forward: in_dim=16, h_dim=32, out_dim=8, B=32.
    B, IN, H, OUT = 32, 16, 32, 8

    key = jax.random.PRNGKey(0)
    kx, k1, k2, k3, k4 = jax.random.split(key, 5)

    x = jax.random.normal(kx, (B, IN), dtype=jnp.float32)
    # Deterministic parameter init (uniform fan-in scaling, akin to nn.Linear default),
    # stored in x@W layout.
    w1 = jax.random.uniform(k1, (IN, H), jnp.float32, -1.0, 1.0) / jnp.sqrt(IN)
    b1 = jax.random.uniform(k2, (1, H), jnp.float32, -1.0, 1.0) / jnp.sqrt(IN)
    w2 = jax.random.uniform(k3, (H, OUT), jnp.float32, -1.0, 1.0) / jnp.sqrt(H)
    b2 = jax.random.uniform(k4, (1, OUT), jnp.float32, -1.0, 1.0) / jnp.sqrt(H)

    # One-time preprocessing (hidden dim zero-padded to 128; f32 weights for the demo,
    # pass param_dtype=jnp.bfloat16 on v6e/v7x).
    pw1, pb1, pw2, pb2 = prepare_params(w1, b1, w2, b2, param_dtype=jnp.float32)

    # Default tm -> single-step grid for this small B (no batch padding path hit).
    out = policy_forward(x, pw1, pb1, pw2, pb2)
    jax.block_until_ready(out)

    # Also exercise the multi-step pipelined grid (4 steps) for coverage.
    out_multi = policy_forward(x, pw1, pb1, pw2, pb2, tm=8)
    jax.block_until_ready(out_multi)

    # Pure-JAX reference with the ORIGINAL (unpadded) parameters.
    h_ref = jnp.maximum(x @ w1 + b1, 0.0)
    ref = jax.nn.softmax(h_ref @ w2 + b2, axis=1)

    assert out.shape == (B, OUT)
    assert jnp.allclose(out, ref, atol=1e-3, rtol=1e-3), float(jnp.max(jnp.abs(out - ref)))
    assert jnp.allclose(out_multi, ref, atol=1e-3, rtol=1e-3)
    assert jnp.allclose(jnp.sum(out, axis=1), 1.0, atol=1e-5)

    print("KERNEL_OK")
</pallas_src>

<mosaic_0001>
module attributes {stable_mosaic.version = 11 : i64} {
  func.func @policy_kernel(%arg0: i32, %arg1: memref<32x16xf32, #tpu.memory_space<vmem>>, %arg2: memref<16x128xf32, #tpu.memory_space<vmem>>, %arg3: memref<1x128xf32, #tpu.memory_space<vmem>>, %arg4: memref<128x8xf32, #tpu.memory_space<vmem>>, %arg5: memref<1x8xf32, #tpu.memory_space<vmem>>, %arg6: memref<32x8xf32, #tpu.memory_space<vmem>>) attributes {dimension_semantics = [#tpu.dimension_semantics<parallel>], iteration_bounds = array<i64: 1>, scalar_prefetch = 0 : i64, scratch_operands = 0 : i64, tpu.core_type = #tpu.core_type<tc>, window_params = [{transform_indices = @transform_0, window_bounds = array<i64: 32, 16>}, {pipeline_mode = #tpu.pipeline_mode<synchronous>, transform_indices = @transform_1, window_bounds = array<i64: 16, 128>}, {pipeline_mode = #tpu.pipeline_mode<synchronous>, transform_indices = @transform_2, window_bounds = array<i64: 1, 128>}, {pipeline_mode = #tpu.pipeline_mode<synchronous>, transform_indices = @transform_3, window_bounds = array<i64: 128, 8>}, {pipeline_mode = #tpu.pipeline_mode<synchronous>, transform_indices = @transform_4, window_bounds = array<i64: 1, 8>}, {transform_indices = @transform_5, window_bounds = array<i64: 32, 8>}]} {
    %c0 = arith.constant 0 : index
    %c0_0 = arith.constant 0 : index
    %0 = vector.load %arg1[%c0, %c0_0] : memref<32x16xf32, #tpu.memory_space<vmem>>, vector<32x16xf32>
    %c0_1 = arith.constant 0 : index
    %c0_2 = arith.constant 0 : index
    %1 = vector.load %arg2[%c0_1, %c0_2] : memref<16x128xf32, #tpu.memory_space<vmem>>, vector<16x128xf32>
    %cst = arith.constant dense<0.000000e+00> : vector<32x128xf32>
    %2 = tpu.matmul %0, %1, %cst {dimension_numbers = #tpu.dot_dimension_numbers<[1], [0], [0], [1], [0, 0, 1, 1], [], []>, precision = #tpu.contract_precision<fp32>} : vector<32x16xf32>, vector<16x128xf32>, vector<32x128xf32> -> vector<32x128xf32>
    %c0_3 = arith.constant 0 : index
    %c0_4 = arith.constant 0 : index
    %3 = vector.load %arg3[%c0_3, %c0_4] : memref<1x128xf32, #tpu.memory_space<vmem>>, vector<1x128xf32>
    %4 = vector.broadcast %3 : vector<1x128xf32> to vector<32x128xf32>
    %5 = arith.addf %2, %4 : vector<32x128xf32>
    %cst_5 = arith.constant 0.000000e+00 : f32
    %6 = vector.broadcast %cst_5 : f32 to vector<32x128xf32>
    %7 = arith.maximumf %5, %6 : vector<32x128xf32>
    %c0_6 = arith.constant 0 : index
    %c0_7 = arith.constant 0 : index
    %8 = vector.load %arg4[%c0_6, %c0_7] : memref<128x8xf32, #tpu.memory_space<vmem>>, vector<128x8xf32>
    %cst_8 = arith.constant dense<0.000000e+00> : vector<32x8xf32>
    %9 = tpu.matmul %7, %8, %cst_8 {dimension_numbers = #tpu.dot_dimension_numbers<[1], [0], [0], [1], [0, 0, 1, 1], [], []>, precision = #tpu.contract_precision<fp32>} : vector<32x128xf32>, vector<128x8xf32>, vector<32x8xf32> -> vector<32x8xf32>
    %c0_9 = arith.constant 0 : index
    %c0_10 = arith.constant 0 : index
    %10 = vector.load %arg5[%c0_9, %c0_10] : memref<1x8xf32, #tpu.memory_space<vmem>>, vector<1x8xf32>
    %11 = vector.broadcast %10 : vector<1x8xf32> to vector<32x8xf32>
    %12 = arith.addf %9, %11 : vector<32x8xf32>
    %cst_11 = arith.constant dense<0xFF800000> : vector<32xf32>
    %13 = vector.multi_reduction <maximumf>, %12, %cst_11 [1] : vector<32x8xf32> to vector<32xf32>
    %14 = vector.shape_cast %13 : vector<32xf32> to vector<32x1xf32>
    %15 = vector.broadcast %14 : vector<32x1xf32> to vector<32x8xf32>
    %16 = arith.subf %12, %15 : vector<32x8xf32>
    %17 = math.exp %16 : vector<32x8xf32>
    %cst_12 = arith.constant dense<0.000000e+00> : vector<32xf32>
    %18 = vector.multi_reduction <add>, %17, %cst_12 [1] : vector<32x8xf32> to vector<32xf32>
    %19 = vector.shape_cast %18 : vector<32xf32> to vector<32x1xf32>
    %20 = vector.broadcast %19 : vector<32x1xf32> to vector<32x8xf32>
    %21 = arith.divf %17, %20 : vector<32x8xf32>
    %c0_13 = arith.constant 0 : index
    %c0_14 = arith.constant 0 : index
    %22 = vector.load %arg6[%c0_13, %c0_14] : memref<32x8xf32, #tpu.memory_space<vmem>>, vector<32x8xf32>
    tpu.vector_store %arg6[%c0_13, %c0_14], %21 {strides = array<i32>} : memref<32x8xf32, #tpu.memory_space<vmem>>, vector<32x8xf32>,
    return
  }
  func.func @transform_0(%arg0: i32) -> (i32, i32) {
    %c0_i32 = arith.constant 0 : i32
    %c0_i32_0 = arith.constant 0 : i32
    return %arg0, %c0_i32 : i32, i32
  }
  func.func @transform_1(%arg0: i32) -> (i32, i32) {
    %c0_i32 = arith.constant 0 : i32
    %c0_i32_0 = arith.constant 0 : i32
    %c0_i32_1 = arith.constant 0 : i32
    return %c0_i32, %c0_i32_0 : i32, i32
  }
  func.func @transform_2(%arg0: i32) -> (i32, i32) {
    %c0_i32 = arith.constant 0 : i32
    %c0_i32_0 = arith.constant 0 : i32
    %c0_i32_1 = arith.constant 0 : i32
    return %c0_i32, %c0_i32_0 : i32, i32
  }
  func.func @transform_3(%arg0: i32) -> (i32, i32) {
    %c0_i32 = arith.constant 0 : i32
    %c0_i32_0 = arith.constant 0 : i32
    %c0_i32_1 = arith.constant 0 : i32
    return %c0_i32, %c0_i32_0 : i32, i32
  }
  func.func @transform_4(%arg0: i32) -> (i32, i32) {
    %c0_i32 = arith.constant 0 : i32
    %c0_i32_0 = arith.constant 0 : i32
    %c0_i32_1 = arith.constant 0 : i32
    return %c0_i32, %c0_i32_0 : i32, i32
  }
  func.func @transform_5(%arg0: i32) -> (i32, i32) {
    %c0_i32 = arith.constant 0 : i32
    %c0_i32_0 = arith.constant 0 : i32
    return %arg0, %c0_i32 : i32, i32
  }
}

</mosaic_0001>

<llo_original>
// kernel: tpu_custom_call.1
$region0: #{tpu_custom_call.1}
  #allocation0 [shape = 'u32[]', space=smem, size = 0x4, offset = 0x4, fixed_abs, tag = 'smem constant byte address 0x4 - core index']
  #allocation1 [shape = 'u32[144,128]{1,0:T(1,128)}', space=vmem, size = 0x12000, scoped, tag = 'internal scratch']
  %s0 = inlined_call_operand.vmem [shape: f32[32,16], index: 0, kind: input, shape index: {}]
  %s1 = inlined_call_operand.vmem [shape: f32[16,128], index: 1, kind: input, shape index: {}]
  %s2 = inlined_call_operand.vmem [shape: f32[1,128], index: 2, kind: input, shape index: {}]
  %s3 = inlined_call_operand.vmem [shape: f32[128,8], index: 3, kind: input, shape index: {}]
  %s4 = inlined_call_operand.vmem [shape: f32[1,8], index: 4, kind: input, shape index: {}]
  %s5 = inlined_call_operand.vmem [shape: f32[32,8], index: 5, kind: output, shape index: {}]
  %s6 = sld [smem:[#allocation0]]
  $region30: #{tpu_custom_call.1} parent=0
    _
  %s8 = ssub.s32 1, %s6
  %s9 = scalar_select 0, %s8, %s6
  // Predicated region
  $region2: #{tpu_custom_call.1} parent=0 // pred_check
    _
  $region3: #{tpu_custom_call.1} parent=0 // pred_check_branch
    %11 = sbr.rel (0) target = $region5
  $region4: #{tpu_custom_call.1} parent=0 // pred_region
    _
  $region5: #{tpu_custom_call.1} parent=0 // pred_fallthru
    _
  // Predicated region
  $region6: #{tpu_custom_call.1} parent=0 // pred_check
    _
  $region7: #{tpu_custom_call.1} parent=0 // pred_check_branch
    %13 = sbr.rel (0) target = $region9
  $region8: #{tpu_custom_call.1} parent=0 // pred_region
    _
  $region9: #{tpu_custom_call.1} parent=0 // pred_fallthru
    _
  // Predicated region
  $region10: #{tpu_custom_call.1} parent=0 // pred_check
    _
  $region11: #{tpu_custom_call.1} parent=0 // pred_check_branch
    %15 = sbr.rel (0) target = $region13
  $region12: #{tpu_custom_call.1} parent=0 // pred_region
    _
  $region13: #{tpu_custom_call.1} parent=0 // pred_fallthru
    _
  // Predicated region
  $region14: #{tpu_custom_call.1} parent=0 // pred_check
    _
  $region15: #{tpu_custom_call.1} parent=0 // pred_check_branch
    %17 = sbr.rel (0) target = $region17
  $region16: #{tpu_custom_call.1} parent=0 // pred_region
    _
  $region17: #{tpu_custom_call.1} parent=0 // pred_fallthru
    _
  // Predicated region
  $region18: #{tpu_custom_call.1} parent=0 // pred_check
    _
  $region19: #{tpu_custom_call.1} parent=0 // pred_check_branch
    %19 = sbr.rel (0) target = $region21
  $region20: #{tpu_custom_call.1} parent=0 // pred_region
    _
  $region21: #{tpu_custom_call.1} parent=0 // pred_fallthru
    _
  %v20 = vld [vmem:[%s0] sm:$0xff]
  %v21 = vld [vmem:[%s0 + $0x8] sm:$0xff]
  %v22 = vld [vmem:[%s0 + $0x10] sm:$0xff]
  %v23 = vld [vmem:[%s0 + $0x18] sm:$0xff]
  %v24 = vld [vmem:[%s1] sm:$0xff]
  %v25 = vld [vmem:[%s1 + $0x8] sm:$0xff]
  %v26 = vld [vmem:[%s2] sm:$0x1]
  %v28 = vlaneseq
  %v29 = vshrl.u32 %v28, 7
  %v30 = vsub.s32 0, %v29
  %v31 = vrot.slane %v26, %v30
  %vm33 = vcmask 130048
  %v35 = vsel %vm33, %v20, 0
  %v38 = vsel %vm33, %v21, 0
  %v41 = vsel %vm33, %v22, 0
  %v44 = vsel %vm33, %v23, 0
  %46 = vmatprep.subr.mxu0 0.0
  %v47 = vand.u32 %v24, 4294901760
  %48 = vmatpush1.msra.mxu0 %v47
  %49 = vmatprep.subr.mxu0 0.0
  %v50 = vand.u32 %v25, 4294901760
  %51 = vmatpush1.msra.mxu0 %v50
  %52 = vmatprep.subr.mxu0 0.0
  %53 = vmatpush1.msra.mxu0 0.0
  %54 = vmatprep.subr.mxu0 0.0
  %55 = vmatpush1.msra.mxu0 0.0
  %56 = vmatprep.subr.mxu0 0.0
  %57 = vmatpush1.msra.mxu0 0.0
  %58 = vmatprep.subr.mxu0 0.0
  %59 = vmatpush1.msra.mxu0 0.0
  %60 = vmatprep.subr.mxu0 0.0
  %61 = vmatpush1.msra.mxu0 0.0
  %62 = vmatprep.subr.mxu0 0.0
  %63 = vmatpush1.msra.mxu0 0.0
  %64 = vmatprep.subr.mxu0 0.0
  %65 = vmatpush1.msra.mxu0 0.0
  %66 = vmatprep.subr.mxu0 0.0
  %67 = vmatpush1.msra.mxu0 0.0
  %68 = vmatprep.subr.mxu0 0.0
  %69 = vmatpush1.msra.mxu0 0.0
  %70 = vmatprep.subr.mxu0 0.0
  %71 = vmatpush1.msra.mxu0 0.0
  %72 = vmatprep.subr.mxu0 0.0
  %73 = vmatpush1.msra.mxu0 0.0
  %74 = vmatprep.subr.mxu0 0.0
  %75 = vmatpush1.msra.mxu0 0.0
  %76 = vmatprep.subr.mxu0 0.0
  %77 = vmatpush1.msra.mxu0 0.0
  %78 = vmatprep.subr.mxu0 0.0
  %79 = vmatpush1.msra.mxu0 0.0
  %80 = vmatprep.subr.mxu0 0.0
  %81 = vmatpush1.msra.mxu0 0.0
  %82 = vmatprep.subr.mxu0 0.0
  %83 = vmatpush1.msra.mxu0 0.0
  %84 = vmatprep.subr.mxu0 0.0
  %85 = vmatpush1.msra.mxu0 0.0
  %86 = vmatprep.subr.mxu0 0.0
  %87 = vmatpush1.msra.mxu0 0.0
  %88 = vmatprep.subr.mxu0 0.0
  %89 = vmatpush1.msra.mxu0 0.0
  %90 = vmatprep.subr.mxu0 0.0
  %91 = vmatpush1.msra.mxu0 0.0
  %92 = vmatprep.subr.mxu0 0.0
  %93 = vmatpush1.msra.mxu0 0.0
  %94 = vmatprep.subr.mxu0 0.0
  %95 = vmatpush1.msra.mxu0 0.0
  %96 = vmatprep.subr.mxu0 0.0
  %97 = vmatpush1.msra.mxu0 0.0
  %98 = vmatprep.subr.mxu0 0.0
  %99 = vmatpush1.msra.mxu0 0.0
  %100 = vmatprep.subr.mxu0 0.0
  %101 = vmatpush1.msra.mxu0 0.0
  %102 = vmatprep.subr.mxu0 0.0
  %103 = vmatpush1.msra.mxu0 0.0
  %104 = vmatprep.subr.mxu0 0.0
  %105 = vmatpush1.msra.mxu0 0.0
  %106 = vmatprep.subr.mxu0 0.0
  %107 = vmatpush1.msra.mxu0 0.0
  %108 = vmatprep.subr.mxu0 0.0
  %109 = vmatpush1.msra.mxu0 0.0
  %110 = vmatprep.subr.mxu0 0.0
  %111 = vmatpush1.msra.mxu0 0.0
  %112 = vmatprep.mubr.f32.mxu0 0.0
  %v113 = vand.u32 %v35, 4294901760
  %v114 = vsub.f32 %v35, %v113
  %v115 = vand.u32 %v114, 4294901760
  %v116 = vsub.f32 %v114, %v115
  %v117 = vand.u32 %v116, 4294901760
  %118 = vmatmul.mubr.f32.gmra.mrb[0].mxu0 %v117
  %v119 = vpop.f32.mrb[0].mxu0
  %v120 = vadd.f32 %v31, %v119
  %v121 = vpop.f32.mrb[0].mxu0
  %122 = vmatprep.mubr.f32.mxu0 0.0
  %v123 = vand.u32 %v38, 4294901760
  %v124 = vsub.f32 %v38, %v123
  %v125 = vand.u32 %v124, 4294901760
  %v126 = vsub.f32 %v124, %v125
  %v127 = vand.u32 %v126, 4294901760
  %128 = vmatmul.mubr.f32.gmra.mrb[0].mxu0 %v127
  %v129 = vpop.f32.mrb[0].mxu0
  %v130 = vadd.f32 %v31, %v129
  %v131 = vpop.f32.mrb[0].mxu0
  %132 = vmatprep.mubr.f32.mxu0 0.0
  %v133 = vand.u32 %v41, 4294901760
  %v134 = vsub.f32 %v41, %v133
  %v135 = vand.u32 %v134, 4294901760
  %v136 = vsub.f32 %v134, %v135
  %v137 = vand.u32 %v136, 4294901760
  %138 = vmatmul.mubr.f32.gmra.mrb[0].mxu0 %v137
  %v139 = vpop.f32.mrb[0].mxu0
  %v140 = vadd.f32 %v31, %v139
  %v141 = vpop.f32.mrb[0].mxu0
  %142 = vmatprep.mubr.f32.mxu0 0.0
  %v143 = vand.u32 %v44, 4294901760
  %v144 = vsub.f32 %v44, %v143
  %v145 = vand.u32 %v144, 4294901760
  %v146 = vsub.f32 %v144, %v145
  %v147 = vand.u32 %v146, 4294901760
  %148 = vmatmul.mubr.f32.gmra.mrb[0].mxu0 %v147
  %v149 = vpop.f32.mrb[0].mxu0
  %v150 = vadd.f32 %v31, %v149
  %v151 = vpop.f32.mrb[0].mxu0
  %152 = vdwg.mxu0
  %153 = vmatprep.subr.mxu0 0.0
  %v154 = vand.u32 %v24, 4294901760
  %v155 = vsub.f32 %v24, %v154
  %v156 = vand.u32 %v155, 4294901760
  %v157 = vsub.f32 %v155, %v156
  %v158 = vand.u32 %v157, 4294901760
  %159 = vmatpush1.msra.mxu0 %v158
  %160 = vmatprep.subr.mxu0 0.0
  %v161 = vand.u32 %v25, 4294901760
  %v162 = vsub.f32 %v25, %v161
  %v163 = vand.u32 %v162, 4294901760
  %v164 = vsub.f32 %v162, %v163
  %v165 = vand.u32 %v164, 4294901760
  %166 = vmatpush1.msra.mxu0 %v165
  %167 = vmatprep.subr.mxu0 0.0
  %168 = vmatpush1.msra.mxu0 0.0
  %169 = vmatprep.subr.mxu0 0.0
  %170 = vmatpush1.msra.mxu0 0.0
  %171 = vmatprep.subr.mxu0 0.0
  %172 = vmatpush1.msra.mxu0 0.0
  %173 = vmatprep.subr.mxu0 0.0
  %174 = vmatpush1.msra.mxu0 0.0
  %175 = vmatprep.subr.mxu0 0.0
  %176 = vmatpush1.msra.mxu0 0.0
  %177 = vmatprep.subr.mxu0 0.0
  %178 = vmatpush1.msra.mxu0 0.0
  %179 = vmatprep.subr.mxu0 0.0
  %180 = vmatpush1.msra.mxu0 0.0
  %181 = vmatprep.subr.mxu0 0.0
  %182 = vmatpush1.msra.mxu0 0.0
  %183 = vmatprep.subr.mxu0 0.0
  %184 = vmatpush1.msra.mxu0 0.0
  %185 = vmatprep.subr.mxu0 0.0
  %186 = vmatpush1.msra.mxu0 0.0
  %187 = vmatprep.subr.mxu0 0.0
  %188 = vmatpush1.msra.mxu0 0.0
  %189 = vmatprep.subr.mxu0 0.0
  %190 = vmatpush1.msra.mxu0 0.0
  %191 = vmatprep.subr.mxu0 0.0
  %192 = vmatpush1.msra.mxu0 0.0
  %193 = vmatprep.subr.mxu0 0.0
  %194 = vmatpush1.msra.mxu0 0.0
  %195 = vmatprep.subr.mxu0 0.0
  %196 = vmatpush1.msra.mxu0 0.0
  %197 = vmatprep.subr.mxu0 0.0
  %198 = vmatpush1.msra.mxu0 0.0
  %199 = vmatprep.subr.mxu0 0.0
  %200 = vmatpush1.msra.mxu0 0.0
  %201 = vmatprep.subr.mxu0 0.0
  %202 = vmatpush1.msra.mxu0 0.0
  %203 = vmatprep.subr.mxu0 0.0
  %204 = vmatpush1.msra.mxu0 0.0
  %205 = vmatprep.subr.mxu0 0.0
  %206 = vmatpush1.msra.mxu0 0.0
  %207 = vmatprep.subr.mxu0 0.0
  %208 = vmatpush1.msra.mxu0 0.0
  %209 = vmatprep.subr.mxu0 0.0
  %210 = vmatpush1.msra.mxu0 0.0
  %211 = vmatprep.subr.mxu0 0.0
  %212 = vmatpush1.msra.mxu0 0.0
  %213 = vmatprep.subr.mxu0 0.0
  %214 = vmatpush1.msra.mxu0 0.0
  %215 = vmatprep.subr.mxu0 0.0
  %216 = vmatpush1.msra.mxu0 0.0
  %217 = vmatprep.subr.mxu0 0.0
  %218 = vmatpush1.msra.mxu0 0.0
  %219 = vmatprep.subr.mxu0 0.0
  %220 = vmatpush1.msra.mxu0 0.0
  %221 = vmatprep.subr.mxu0 0.0
  %222 = vmatpush1.msra.mxu0 0.0
  %223 = vmatprep.subr.mxu0 0.0
  %224 = vmatpush1.msra.mxu0 0.0
  %225 = vmatprep.subr.mxu0 0.0
  %226 = vmatpush1.msra.mxu0 0.0
  %227 = vmatprep.mubr.f32.mxu0 0.0
  %v228 = vand.u32 %v35, 4294901760
  %229 = vmatmul.mubr.f32.gmra.mrb[0].mxu0 %v228
  %v230 = vpop.f32.mrb[0].mxu0
  %v231 = vadd.f32 %v120, %v230
  %v232 = vpop.f32.mrb[0].mxu0
  %233 = vmatprep.mubr.f32.mxu0 0.0
  %v234 = vand.u32 %v38, 4294901760
  %235 = vmatmul.mubr.f32.gmra.mrb[0].mxu0 %v234
  %v236 = vpop.f32.mrb[0].mxu0
  %v237 = vadd.f32 %v130, %v236
  %v238 = vpop.f32.mrb[0].mxu0
  %239 = vmatprep.mubr.f32.mxu0 0.0
  %v240 = vand.u32 %v41, 4294901760
  %241 = vmatmul.mubr.f32.gmra.mrb[0].mxu0 %v240
  %v242 = vpop.f32.mrb[0].mxu0
  %v243 = vadd.f32 %v140, %v242
  %v244 = vpop.f32.mrb[0].mxu0
  %245 = vmatprep.mubr.f32.mxu0 0.0
  %v246 = vand.u32 %v44, 4294901760
  %247 = vmatmul.mubr.f32.gmra.mrb[0].mxu0 %v246
  %v248 = vpop.f32.mrb[0].mxu0
  %v249 = vadd.f32 %v150, %v248
  %v250 = vpop.f32.mrb[0].mxu0
  %251 = vdwg.mxu0
  %252 = vmatprep.subr.mxu0 0.0
  %v253 = vand.u32 %v24, 4294901760
  %v254 = vsub.f32 %v24, %v253
  %255 = vmatpush1.msra.mxu0 %v254
  %256 = vmatprep.subr.mxu0 0.0
  %v257 = vand.u32 %v25, 4294901760
  %v258 = vsub.f32 %v25, %v257
  %259 = vmatpush1.msra.mxu0 %v258
  %260 = vmatprep.subr.mxu0 0.0
  %261 = vmatpush1.msra.mxu0 0.0
  %262 = vmatprep.subr.mxu0 0.0
  %263 = vmatpush1.msra.mxu0 0.0
  %264 = vmatprep.subr.mxu0 0.0
  %265 = vmatpush1.msra.mxu0 0.0
  %266 = vmatprep.subr.mxu0 0.0
  %267 = vmatpush1.msra.mxu0 0.0
  %268 = vmatprep.subr.mxu0 0.0
  %269 = vmatpush1.msra.mxu0 0.0
  %270 = vmatprep.subr.mxu0 0.0
  %271 = vmatpush1.msra.mxu0 0.0
  %272 = vmatprep.subr.mxu0 0.0
  %273 = vmatpush1.msra.mxu0 0.0
  %274 = vmatprep.subr.mxu0 0.0
  %275 = vmatpush1.msra.mxu0 0.0
  %276 = vmatprep.subr.mxu0 0.0
  %277 = vmatpush1.msra.mxu0 0.0
  %278 = vmatprep.subr.mxu0 0.0
  %279 = vmatpush1.msra.mxu0 0.0
  %280 = vmatprep.subr.mxu0 0.0
  %281 = vmatpush1.msra.mxu0 0.0
  %282 = vmatprep.subr.mxu0 0.0
  %283 = vmatpush1.msra.mxu0 0.0
  %284 = vmatprep.subr.mxu0 0.0
  %285 = vmatpush1.msra.mxu0 0.0
  %286 = vmatprep.subr.mxu0 0.0
  %287 = vmatpush1.msra.mxu0 0.0
  %288 = vmatprep.subr.mxu0 0.0
  %289 = vmatpush1.msra.mxu0 0.0
  %290 = vmatprep.subr.mxu0 0.0
  %291 = vmatpush1.msra.mxu0 0.0
  %292 = vmatprep.subr.mxu0 0.0
  %293 = vmatpush1.msra.mxu0 0.0
  %294 = vmatprep.subr.mxu0 0.0
  %295 = vmatpush1.msra.mxu0 0.0
  %296 = vmatprep.subr.mxu0 0.0
  %297 = vmatpush1.msra.mxu0 0.0
  %298 = vmatprep.subr.mxu0 0.0
  %299 = vmatpush1.msra.mxu0 0.0
  %300 = vmatprep.subr.mxu0 0.0
  %301 = vmatpush1.msra.mxu0 0.0
  %302 = vmatprep.subr.mxu0 0.0
  %303 = vmatpush1.msra.mxu0 0.0
  %304 = vmatprep.subr.mxu0 0.0
  %305 = vmatpush1.msra.mxu0 0.0
  %306 = vmatprep.subr.mxu0 0.0
  %307 = vmatpush1.msra.mxu0 0.0
  %308 = vmatprep.subr.mxu0 0.0
  %309 = vmatpush1.msra.mxu0 0.0
  %310 = vmatprep.subr.mxu0 0.0
  %311 = vmatpush1.msra.mxu0 0.0
  %312 = vmatprep.subr.mxu0 0.0
  %313 = vmatpush1.msra.mxu0 0.0
  %314 = vmatprep.subr.mxu0 0.0
  %315 = vmatpush1.msra.mxu0 0.0
  %316 = vmatprep.subr.mxu0 0.0
  %317 = vmatpush1.msra.mxu0 0.0
  %318 = vmatprep.subr.mxu0 0.0
  %319 = vmatpush1.msra.mxu0 0.0
  %320 = vmatprep.mubr.f32.mxu0 0.0
  %v321 = vand.u32 %v35, 4294901760
  %v322 = vsub.f32 %v35, %v321
  %323 = vmatmul.mubr.f32.gmra.mrb[0].mxu0 %v322
  %v324 = vpop.f32.mrb[0].mxu0
  %v325 = vadd.f32 %v231, %v324
  %v326 = vpop.f32.mrb[0].mxu0
  %327 = vmatprep.mubr.f32.mxu0 0.0
  %v328 = vand.u32 %v38, 4294901760
  %v329 = vsub.f32 %v38, %v328
  %330 = vmatmul.mubr.f32.gmra.mrb[0].mxu0 %v329
  %v331 = vpop.f32.mrb[0].mxu0
  %v332 = vadd.f32 %v237, %v331
  %v333 = vpop.f32.mrb[0].mxu0
  %334 = vmatprep.mubr.f32.mxu0 0.0
  %v335 = vand.u32 %v41, 4294901760
  %v336 = vsub.f32 %v41, %v335
  %337 = vmatmul.mubr.f32.gmra.mrb[0].mxu0 %v336
  %v338 = vpop.f32.mrb[0].mxu0
  %v339 = vadd.f32 %v243, %v338
  %v340 = vpop.f32.mrb[0].mxu0
  %341 = vmatprep.mubr.f32.mxu0 0.0
  %v342 = vand.u32 %v44, 4294901760
  %v343 = vsub.f32 %v44, %v342
  %344 = vmatmul.mubr.f32.gmra.mrb[0].mxu0 %v343
  %v345 = vpop.f32.mrb[0].mxu0
  %v346 = vadd.f32 %v249, %v345
  %v347 = vpop.f32.mrb[0].mxu0
  %348 = vdwg.mxu0
  %349 = vmatprep.subr.mxu0 0.0
  %v350 = vand.u32 %v24, 4294901760
  %351 = vmatpush1.msra.mxu0 %v350
  %352 = vmatprep.subr.mxu0 0.0
  %v353 = vand.u32 %v25, 4294901760
  %354 = vmatpush1.msra.mxu0 %v353
  %355 = vmatprep.subr.mxu0 0.0
  %356 = vmatpush1.msra.mxu0 0.0
  %357 = vmatprep.subr.mxu0 0.0
  %358 = vmatpush1.msra.mxu0 0.0
  %359 = vmatprep.subr.mxu0 0.0
  %360 = vmatpush1.msra.mxu0 0.0
  %361 = vmatprep.subr.mxu0 0.0
  %362 = vmatpush1.msra.mxu0 0.0
  %363 = vmatprep.subr.mxu0 0.0
  %364 = vmatpush1.msra.mxu0 0.0
  %365 = vmatprep.subr.mxu0 0.0
  %366 = vmatpush1.msra.mxu0 0.0
  %367 = vmatprep.subr.mxu0 0.0
  %368 = vmatpush1.msra.mxu0 0.0
  %369 = vmatprep.subr.mxu0 0.0
  %370 = vmatpush1.msra.mxu0 0.0
  %371 = vmatprep.subr.mxu0 0.0
  %372 = vmatpush1.msra.mxu0 0.0
  %373 = vmatprep.subr.mxu0 0.0
  %374 = vmatpush1.msra.mxu0 0.0
  %375 = vmatprep.subr.mxu0 0.0
  %376 = vmatpush1.msra.mxu0 0.0
  %377 = vmatprep.subr.mxu0 0.0
  %378 = vmatpush1.msra.mxu0 0.0
  %379 = vmatprep.subr.mxu0 0.0
  %380 = vmatpush1.msra.mxu0 0.0
  %381 = vmatprep.subr.mxu0 0.0
  %382 = vmatpush1.msra.mxu0 0.0
  %383 = vmatprep.subr.mxu0 0.0
  %384 = vmatpush1.msra.mxu0 0.0
  %385 = vmatprep.subr.mxu0 0.0
  %386 = vmatpush1.msra.mxu0 0.0
  %387 = vmatprep.subr.mxu0 0.0
  %388 = vmatpush1.msra.mxu0 0.0
  %389 = vmatprep.subr.mxu0 0.0
  %390 = vmatpush1.msra.mxu0 0.0
  %391 = vmatprep.subr.mxu0 0.0
  %392 = vmatpush1.msra.mxu0 0.0
  %393 = vmatprep.subr.mxu0 0.0
  %394 = vmatpush1.msra.mxu0 0.0
  %395 = vmatprep.subr.mxu0 0.0
  %396 = vmatpush1.msra.mxu0 0.0
  %397 = vmatprep.subr.mxu0 0.0
  %398 = vmatpush1.msra.mxu0 0.0
  %399 = vmatprep.subr.mxu0 0.0
  %400 = vmatpush1.msra.mxu0 0.0
  %401 = vmatprep.subr.mxu0 0.0
  %402 = vmatpush1.msra.mxu0 0.0
  %403 = vmatprep.subr.mxu0 0.0
  %404 = vmatpush1.msra.mxu0 0.0
  %405 = vmatprep.subr.mxu0 0.0
  %406 = vmatpush1.msra.mxu0 0.0
  %407 = vmatprep.subr.mxu0 0.0
  %408 = vmatpush1.msra.mxu0 0.0
  %409 = vmatprep.subr.mxu0 0.0
  %410 = vmatpush1.msra.mxu0 0.0
  %411 = vmatprep.subr.mxu0 0.0
  %412 = vmatpush1.msra.mxu0 0.0
  %413 = vmatprep.subr.mxu0 0.0
  %414 = vmatpush1.msra.mxu0 0.0
  %415 = vmatprep.mubr.f32.mxu0 0.0
  %v416 = vand.u32 %v35, 4294901760
  %v417 = vsub.f32 %v35, %v416
  %v418 = vand.u32 %v417, 4294901760
  %419 = vmatmul.mubr.f32.gmra.mrb[0].mxu0 %v418
  %v420 = vpop.f32.mrb[0].mxu0
  %v421 = vadd.f32 %v325, %v420
  %v422 = vpop.f32.mrb[0].mxu0
  %423 = vmatprep.mubr.f32.mxu0 0.0
  %v424 = vand.u32 %v38, 4294901760
  %v425 = vsub.f32 %v38, %v424
  %v426 = vand.u32 %v425, 4294901760
  %427 = vmatmul.mubr.f32.gmra.mrb[0].mxu0 %v426
  %v428 = vpop.f32.mrb[0].mxu0
  %v429 = vadd.f32 %v332, %v428
  %v430 = vpop.f32.mrb[0].mxu0
  %431 = vmatprep.mubr.f32.mxu0 0.0
  %v432 = vand.u32 %v41, 4294901760
  %v433 = vsub.f32 %v41, %v432
  %v434 = vand.u32 %v433, 4294901760
  %435 = vmatmul.mubr.f32.gmra.mrb[0].mxu0 %v434
  %v436 = vpop.f32.mrb[0].mxu0
  %v437 = vadd.f32 %v339, %v436
  %v438 = vpop.f32.mrb[0].mxu0
  %439 = vmatprep.mubr.f32.mxu0 0.0
  %v440 = vand.u32 %v44, 4294901760
  %v441 = vsub.f32 %v44, %v440
  %v442 = vand.u32 %v441, 4294901760
  %443 = vmatmul.mubr.f32.gmra.mrb[0].mxu0 %v442
  %v444 = vpop.f32.mrb[0].mxu0
  %v445 = vadd.f32 %v346, %v444
  %v446 = vpop.f32.mrb[0].mxu0
  %447 = vdwg.mxu0
  %448 = vmatprep.subr.mxu0 0.0
  %v449 = vand.u32 %v24, 4294901760
  %v450 = vsub.f32 %v24, %v449
  %v451 = vand.u32 %v450, 4294901760
  %452 = vmatpush1.msra.mxu0 %v451
  %453 = vmatprep.subr.mxu0 0.0
  %v454 = vand.u32 %v25, 4294901760
  %v455 = vsub.f32 %v25, %v454
  %v456 = vand.u32 %v455, 4294901760
  %457 = vmatpush1.msra.mxu0 %v456
  %458 = vmatprep.subr.mxu0 0.0
  %459 = vmatpush1.msra.mxu0 0.0
  %460 = vmatprep.subr.mxu0 0.0
  %461 = vmatpush1.msra.mxu0 0.0
  %462 = vmatprep.subr.mxu0 0.0
  %463 = vmatpush1.msra.mxu0 0.0
  %464 = vmatprep.subr.mxu0 0.0
  %465 = vmatpush1.msra.mxu0 0.0
  %466 = vmatprep.subr.mxu0 0.0
  %467 = vmatpush1.msra.mxu0 0.0
  %468 = vmatprep.subr.mxu0 0.0
  %469 = vmatpush1.msra.mxu0 0.0
  %470 = vmatprep.subr.mxu0 0.0
  %471 = vmatpush1.msra.mxu0 0.0
  %472 = vmatprep.subr.mxu0 0.0
  %473 = vmatpush1.msra.mxu0 0.0
  %474 = vmatprep.subr.mxu0 0.0
  %475 = vmatpush1.msra.mxu0 0.0
  %476 = vmatprep.subr.mxu0 0.0
  %477 = vmatpush1.msra.mxu0 0.0
  %478 = vmatprep.subr.mxu0 0.0
  %479 = vmatpush1.msra.mxu0 0.0
  %480 = vmatprep.subr.mxu0 0.0
  %481 = vmatpush1.msra.mxu0 0.0
  %482 = vmatprep.subr.mxu0 0.0
  %483 = vmatpush1.msra.mxu0 0.0
  %484 = vmatprep.subr.mxu0 0.0
  %485 = vmatpush1.msra.mxu0 0.0
  %486 = vmatprep.subr.mxu0 0.0
  %487 = vmatpush1.msra.mxu0 0.0
  %488 = vmatprep.subr.mxu0 0.0
  %489 = vmatpush1.msra.mxu0 0.0
  %490 = vmatprep.subr.mxu0 0.0
  %491 = vmatpush1.msra.mxu0 0.0
  %492 = vmatprep.subr.mxu0 0.0
  %493 = vmatpush1.msra.mxu0 0.0
  %494 = vmatprep.subr.mxu0 0.0
  %495 = vmatpush1.msra.mxu0 0.0
  %496 = vmatprep.subr.mxu0 0.0
  %497 = vmatpush1.msra.mxu0 0.0
  %498 = vmatprep.subr.mxu0 0.0
  %499 = vmatpush1.msra.mxu0 0.0
  %500 = vmatprep.subr.mxu0 0.0
  %501 = vmatpush1.msra.mxu0 0.0
  %502 = vmatprep.subr.mxu0 0.0
  %503 = vmatpush1.msra.mxu0 0.0
  %504 = vmatprep.subr.mxu0 0.0
  %505 = vmatpush1.msra.mxu0 0.0
  %506 = vmatprep.subr.mxu0 0.0
  %507 = vmatpush1.msra.mxu0 0.0
  %508 = vmatprep.subr.mxu0 0.0
  %509 = vmatpush1.msra.mxu0 0.0
  %510 = vmatprep.subr.mxu0 0.0
  %511 = vmatpush1.msra.mxu0 0.0
  %512 = vmatprep.subr.mxu0 0.0
  %513 = vmatpush1.msra.mxu0 0.0
  %514 = vmatprep.subr.mxu0 0.0
  %515 = vmatpush1.msra.mxu0 0.0
  %516 = vmatprep.subr.mxu0 0.0
  %517 = vmatpush1.msra.mxu0 0.0
  %518 = vmatprep.mubr.f32.mxu0 0.0
  %v519 = vand.u32 %v35, 4294901760
  %520 = vmatmul.mubr.f32.gmra.mrb[0].mxu0 %v519
  %v521 = vpop.f32.mrb[0].mxu0
  %v522 = vadd.f32 %v421, %v521
  %v523 = vpop.f32.mrb[0].mxu0
  %524 = vmatprep.mubr.f32.mxu0 0.0
  %v525 = vand.u32 %v38, 4294901760
  %526 = vmatmul.mubr.f32.gmra.mrb[0].mxu0 %v525
  %v527 = vpop.f32.mrb[0].mxu0
  %v528 = vadd.f32 %v429, %v527
  %v529 = vpop.f32.mrb[0].mxu0
  %530 = vmatprep.mubr.f32.mxu0 0.0
  %v531 = vand.u32 %v41, 4294901760
  %532 = vmatmul.mubr.f32.gmra.mrb[0].mxu0 %v531
  %v533 = vpop.f32.mrb[0].mxu0
  %v534 = vadd.f32 %v437, %v533
  %v535 = vpop.f32.mrb[0].mxu0
  %536 = vmatprep.mubr.f32.mxu0 0.0
  %v537 = vand.u32 %v44, 4294901760
  %538 = vmatmul.mubr.f32.gmra.mrb[0].mxu0 %v537
  %v539 = vpop.f32.mrb[0].mxu0
  %v540 = vadd.f32 %v445, %v539
  %v541 = vpop.f32.mrb[0].mxu0
  %542 = vdwg.mxu0
  %543 = vmatprep.subr.mxu0 0.0
  %v544 = vand.u32 %v24, 4294901760
  %545 = vmatpush1.msra.mxu0 %v544
  %546 = vmatprep.subr.mxu0 0.0
  %v547 = vand.u32 %v25, 4294901760
  %548 = vmatpush1.msra.mxu0 %v547
  %549 = vmatprep.subr.mxu0 0.0
  %550 = vmatpush1.msra.mxu0 0.0
  %551 = vmatprep.subr.mxu0 0.0
  %552 = vmatpush1.msra.mxu0 0.0
  %553 = vmatprep.subr.mxu0 0.0
  %554 = vmatpush1.msra.mxu0 0.0
  %555 = vmatprep.subr.mxu0 0.0
  %556 = vmatpush1.msra.mxu0 0.0
  %557 = vmatprep.subr.mxu0 0.0
  %558 = vmatpush1.msra.mxu0 0.0
  %559 = vmatprep.subr.mxu0 0.0
  %560 = vmatpush1.msra.mxu0 0.0
  %561 = vmatprep.subr.mxu0 0.0
  %562 = vmatpush1.msra.mxu0 0.0
  %563 = vmatprep.subr.mxu0 0.0
  %564 = vmatpush1.msra.mxu0 0.0
  %565 = vmatprep.subr.mxu0 0.0
  %566 = vmatpush1.msra.mxu0 0.0
  %567 = vmatprep.subr.mxu0 0.0
  %568 = vmatpush1.msra.mxu0 0.0
  %569 = vmatprep.subr.mxu0 0.0
  %570 = vmatpush1.msra.mxu0 0.0
  %571 = vmatprep.subr.mxu0 0.0
  %572 = vmatpush1.msra.mxu0 0.0
  %573 = vmatprep.subr.mxu0 0.0
  %574 = vmatpush1.msra.mxu0 0.0
  %575 = vmatprep.subr.mxu0 0.0
  %576 = vmatpush1.msra.mxu0 0.0
  %577 = vmatprep.subr.mxu0 0.0
  %578 = vmatpush1.msra.mxu0 0.0
  %579 = vmatprep.subr.mxu0 0.0
  %580 = vmatpush1.msra.mxu0 0.0
  %581 = vmatprep.subr.mxu0 0.0
  %582 = vmatpush1.msra.mxu0 0.0
  %583 = vmatprep.subr.mxu0 0.0
  %584 = vmatpush1.msra.mxu0 0.0
  %585 = vmatprep.subr.mxu0 0.0
  %586 = vmatpush1.msra.mxu0 0.0
  %587 = vmatprep.subr.mxu0 0.0
  %588 = vmatpush1.msra.mxu0 0.0
  %589 = vmatprep.subr.mxu0 0.0
  %590 = vmatpush1.msra.mxu0 0.0
  %591 = vmatprep.subr.mxu0 0.0
  %592 = vmatpush1.msra.mxu0 0.0
  %593 = vmatprep.subr.mxu0 0.0
  %594 = vmatpush1.msra.mxu0 0.0
  %595 = vmatprep.subr.mxu0 0.0
  %596 = vmatpush1.msra.mxu0 0.0
  %597 = vmatprep.subr.mxu0 0.0
  %598 = vmatpush1.msra.mxu0 0.0
  %599 = vmatprep.subr.mxu0 0.0
  %600 = vmatpush1.msra.mxu0 0.0
  %601 = vmatprep.subr.mxu0 0.0
  %602 = vmatpush1.msra.mxu0 0.0
  %603 = vmatprep.subr.mxu0 0.0
  %604 = vmatpush1.msra.mxu0 0.0
  %605 = vmatprep.subr.mxu0 0.0
  %606 = vmatpush1.msra.mxu0 0.0
  %607 = vmatprep.subr.mxu0 0.0
  %608 = vmatpush1.msra.mxu0 0.0
  %609 = vmatprep.mubr.f32.mxu0 0.0
  %v610 = vand.u32 %v35, 4294901760
  %611 = vmatmul.mubr.f32.gmra.mrb[0].mxu0 %v610
  %v612 = vpop.f32.mrb[0].mxu0
  %v613 = vadd.f32 %v522, %v612
  %v614 = vpop.f32.mrb[0].mxu0
  %615 = vmatprep.mubr.f32.mxu0 0.0
  %v616 = vand.u32 %v38, 4294901760
  %617 = vmatmul.mubr.f32.gmra.mrb[0].mxu0 %v616
  %v618 = vpop.f32.mrb[0].mxu0
  %v619 = vadd.f32 %v528, %v618
  %v620 = vpop.f32.mrb[0].mxu0
  %621 = vmatprep.mubr.f32.mxu0 0.0
  %v622 = vand.u32 %v41, 4294901760
  %623 = vmatmul.mubr.f32.gmra.mrb[0].mxu0 %v622
  %v624 = vpop.f32.mrb[0].mxu0
  %v625 = vadd.f32 %v534, %v624
  %v626 = vpop.f32.mrb[0].mxu0
  %627 = vmatprep.mubr.f32.mxu0 0.0
  %v628 = vand.u32 %v44, 4294901760
  %629 = vmatmul.mubr.f32.gmra.mrb[0].mxu0 %v628
  %v630 = vpop.f32.mrb[0].mxu0
  %v631 = vadd.f32 %v540, %v630
  %v632 = vpop.f32.mrb[0].mxu0
  %633 = vdwg.mxu0
  %v634 = vmax.f32 %v613, 0.0
  %v635 = vmax.f32 %v619, 0.0
  %v636 = vmax.f32 %v625, 0.0
  %v637 = vmax.f32 %v631, 0.0
  %v638 = vld [vmem:[%s3] sm:$0xff]
  %v639 = vld [vmem:[%s3 + $0x8] sm:$0xff]
  %v640 = vld [vmem:[%s3 + $0x10] sm:$0xff]
  %v641 = vld [vmem:[%s3 + $0x18] sm:$0xff]
  %v642 = vld [vmem:[%s3 + $0x20] sm:$0xff]
  %v643 = vld [vmem:[%s3 + $0x28] sm:$0xff]
  %v644 = vld [vmem:[%s3 + $0x30] sm:$0xff]
  %v645 = vld [vmem:[%s3 + $0x38] sm:$0xff]
  %v646 = vld [vmem:[%s3 + $0x40] sm:$0xff]
  %v647 = vld [vmem:[%s3 + $0x48] sm:$0xff]
  %v648 = vld [vmem:[%s3 + $0x50] sm:$0xff]
  %v649 = vld [vmem:[%s3 + $0x58] sm:$0xff]
  %v650 = vld [vmem:[%s3 + $0x60] sm:$0xff]
  %v651 = vld [vmem:[%s3 + $0x68] sm:$0xff]
  %v652 = vld [vmem:[%s3 + $0x70] sm:$0xff]
  %v653 = vld [vmem:[%s3 + $0x78] sm:$0xff]
  %v654 = vld [vmem:[%s4] sm:$0x1]
  %v656 = vlaneseq
  %v657 = vshrl.u32 %v656, 7
  %v658 = vsub.s32 0, %v657
  %v659 = vrot.slane %v654, %v658
  %661 = vmatprep.subr.mxu0 0.0
  %v662 = vand.u32 %v638, 4294901760
  %663 = vmatpush1.msra.mxu0 %v662
  %664 = vmatprep.subr.mxu0 0.0
  %v665 = vand.u32 %v639, 4294901760
  %666 = vmatpush1.msra.mxu0 %v665
  %667 = vmatprep.subr.mxu0 0.0
  %v668 = vand.u32 %v640, 4294901760
  %669 = vmatpush1.msra.mxu0 %v668
  %670 = vmatprep.subr.mxu0 0.0
  %v671 = vand.u32 %v641, 4294901760
  %672 = vmatpush1.msra.mxu0 %v671
  %673 = vmatprep.subr.mxu0 0.0
  %v674 = vand.u32 %v642, 4294901760
  %675 = vmatpush1.msra.mxu0 %v674
  %676 = vmatprep.subr.mxu0 0.0
  %v677 = vand.u32 %v643, 4294901760
  %678 = vmatpush1.msra.mxu0 %v677
  %679 = vmatprep.subr.mxu0 0.0
  %v680 = vand.u32 %v644, 4294901760
  %681 = vmatpush1.msra.mxu0 %v680
  %682 = vmatprep.subr.mxu0 0.0
  %v683 = vand.u32 %v645, 4294901760
  %684 = vmatpush1.msra.mxu0 %v683
  %685 = vmatprep.subr.mxu0 0.0
  %v686 = vand.u32 %v646, 4294901760
  %687 = vmatpush1.msra.mxu0 %v686
  %688 = vmatprep.subr.mxu0 0.0
  %v689 = vand.u32 %v647, 4294901760
  %690 = vmatpush1.msra.mxu0 %v689
  %691 = vmatprep.subr.mxu0 0.0
  %v692 = vand.u32 %v648, 4294901760
  %693 = vmatpush1.msra.mxu0 %v692
  %694 = vmatprep.subr.mxu0 0.0
  %v695 = vand.u32 %v649, 4294901760
  %696 = vmatpush1.msra.mxu0 %v695
  %697 = vmatprep.subr.mxu0 0.0
  %v698 = vand.u32 %v650, 4294901760
  %699 = vmatpush1.msra.mxu0 %v698
  %700 = vmatprep.subr.mxu0 0.0
  %v701 = vand.u32 %v651, 4294901760
  %702 = vmatpush1.msra.mxu0 %v701
  %703 = vmatprep.subr.mxu0 0.0
  %v704 = vand.u32 %v652, 4294901760
  %705 = vmatpush1.msra.mxu0 %v704
  %706 = vmatprep.subr.mxu0 0.0
  %v707 = vand.u32 %v653, 4294901760
  %708 = vmatpush1.msra.mxu0 %v707
  %709 = vmatprep.subr.mxu0 0.0
  %710 = vmatpush1.msra.mxu0 0.0
  %711 = vmatprep.subr.mxu0 0.0
  %712 = vmatpush1.msra.mxu0 0.0
  %713 = vmatprep.subr.mxu0 0.0
  %714 = vmatpush1.msra.mxu0 0.0
  %715 = vmatprep.subr.mxu0 0.0
  %716 = vmatpush1.msra.mxu0 0.0
  %717 = vmatprep.subr.mxu0 0.0
  %718 = vmatpush1.msra.mxu0 0.0
  %719 = vmatprep.subr.mxu0 0.0
  %720 = vmatpush1.msra.mxu0 0.0
  %721 = vmatprep.subr.mxu0 0.0
  %722 = vmatpush1.msra.mxu0 0.0
  %723 = vmatprep.subr.mxu0 0.0
  %724 = vmatpush1.msra.mxu0 0.0
  %725 = vmatprep.subr.mxu0 0.0
  %726 = vmatpush1.msra.mxu0 0.0
  %727 = vmatprep.subr.mxu0 0.0
  %728 = vmatpush1.msra.mxu0 0.0
  %729 = vmatprep.subr.mxu0 0.0
  %730 = vmatpush1.msra.mxu0 0.0
  %731 = vmatprep.subr.mxu0 0.0
  %732 = vmatpush1.msra.mxu0 0.0
  %733 = vmatprep.subr.mxu0 0.0
  %734 = vmatpush1.msra.mxu0 0.0
  %735 = vmatprep.subr.mxu0 0.0
  %736 = vmatpush1.msra.mxu0 0.0
  %737 = vmatprep.subr.mxu0 0.0
  %738 = vmatpush1.msra.mxu0 0.0
  %739 = vmatprep.subr.mxu0 0.0
  %740 = vmatpush1.msra.mxu0 0.0
  %741 = vmatprep.mubr.f32.mxu0 0.0
  %v742 = vand.u32 %v634, 4294901760
  %v743 = vsub.f32 %v634, %v742
  %v744 = vand.u32 %v743, 4294901760
  %v745 = vsub.f32 %v743, %v744
  %v746 = vand.u32 %v745, 4294901760
  %747 = vmatmul.mubr.f32.gmra.mrb[0].mxu0 %v746
  %v748 = vpop.f32.mrb[0].mxu0
  %v749 = vadd.f32 %v659, %v748
  %v750 = vpop.f32.mrb[0].mxu0
  %751 = vmatprep.mubr.f32.mxu0 0.0
  %v752 = vand.u32 %v635, 4294901760
  %v753 = vsub.f32 %v635, %v752
  %v754 = vand.u32 %v753, 4294901760
  %v755 = vsub.f32 %v753, %v754
  %v756 = vand.u32 %v755, 4294901760
  %757 = vmatmul.mubr.f32.gmra.mrb[0].mxu0 %v756
  %v758 = vpop.f32.mrb[0].mxu0
  %v759 = vadd.f32 %v659, %v758
  %v760 = vpop.f32.mrb[0].mxu0
  %761 = vmatprep.mubr.f32.mxu0 0.0
  %v762 = vand.u32 %v636, 4294901760
  %v763 = vsub.f32 %v636, %v762
  %v764 = vand.u32 %v763, 4294901760
  %v765 = vsub.f32 %v763, %v764
  %v766 = vand.u32 %v765, 4294901760
  %767 = vmatmul.mubr.f32.gmra.mrb[0].mxu0 %v766
  %v768 = vpop.f32.mrb[0].mxu0
  %v769 = vadd.f32 %v659, %v768
  %v770 = vpop.f32.mrb[0].mxu0
  %771 = vmatprep.mubr.f32.mxu0 0.0
  %v772 = vand.u32 %v637, 4294901760
  %v773 = vsub.f32 %v637, %v772
  %v774 = vand.u32 %v773, 4294901760
  %v775 = vsub.f32 %v773, %v774
  %v776 = vand.u32 %v775, 4294901760
  %777 = vmatmul.mubr.f32.gmra.mrb[0].mxu0 %v776
  %v778 = vpop.f32.mrb[0].mxu0
  %v779 = vadd.f32 %v659, %v778
  %v780 = vpop.f32.mrb[0].mxu0
  %781 = vdwg.mxu0
  %782 = vmatprep.subr.mxu0 0.0
  %v783 = vand.u32 %v638, 4294901760
  %v784 = vsub.f32 %v638, %v783
  %v785 = vand.u32 %v784, 4294901760
  %v786 = vsub.f32 %v784, %v785
  %v787 = vand.u32 %v786, 4294901760
  %788 = vmatpush1.msra.mxu0 %v787
  %789 = vmatprep.subr.mxu0 0.0
  %v790 = vand.u32 %v639, 4294901760
  %v791 = vsub.f32 %v639, %v790
  %v792 = vand.u32 %v791, 4294901760
  %v793 = vsub.f32 %v791, %v792
  %v794 = vand.u32 %v793, 4294901760
  %795 = vmatpush1.msra.mxu0 %v794
  %796 = vmatprep.subr.mxu0 0.0
  %v797 = vand.u32 %v640, 4294901760
  %v798 = vsub.f32 %v640, %v797
  %v799 = vand.u32 %v798, 4294901760
  %v800 = vsub.f32 %v798, %v799
  %v801 = vand.u32 %v800, 4294901760
  %802 = vmatpush1.msra.mxu0 %v801
  %803 = vmatprep.subr.mxu0 0.0
  %v804 = vand.u32 %v641, 4294901760
  %v805 = vsub.f32 %v641, %v804
  %v806 = vand.u32 %v805, 4294901760
  %v807 = vsub.f32 %v805, %v806
  %v808 = vand.u32 %v807, 4294901760
  %809 = vmatpush1.msra.mxu0 %v808
  %810 = vmatprep.subr.mxu0 0.0
  %v811 = vand.u32 %v642, 4294901760
  %v812 = vsub.f32 %v642, %v811
  %v813 = vand.u32 %v812, 4294901760
  %v814 = vsub.f32 %v812, %v813
  %v815 = vand.u32 %v814, 4294901760
  %816 = vmatpush1.msra.mxu0 %v815
  %817 = vmatprep.subr.mxu0 0.0
  %v818 = vand.u32 %v643, 4294901760
  %v819 = vsub.f32 %v643, %v818
  %v820 = vand.u32 %v819, 4294901760
  %v821 = vsub.f32 %v819, %v820
  %v822 = vand.u32 %v821, 4294901760
  %823 = vmatpush1.msra.mxu0 %v822
  %824 = vmatprep.subr.mxu0 0.0
  %v825 = vand.u32 %v644, 4294901760
  %v826 = vsub.f32 %v644, %v825
  %v827 = vand.u32 %v826, 4294901760
  %v828 = vsub.f32 %v826, %v827
  %v829 = vand.u32 %v828, 4294901760
  %830 = vmatpush1.msra.mxu0 %v829
  %831 = vmatprep.subr.mxu0 0.0
  %v832 = vand.u32 %v645, 4294901760
  %v833 = vsub.f32 %v645, %v832
  %v834 = vand.u32 %v833, 4294901760
  %v835 = vsub.f32 %v833, %v834
  %v836 = vand.u32 %v835, 4294901760
  %837 = vmatpush1.msra.mxu0 %v836
  %838 = vmatprep.subr.mxu0 0.0
  %v839 = vand.u32 %v646, 4294901760
  %v840 = vsub.f32 %v646, %v839
  %v841 = vand.u32 %v840, 4294901760
  %v842 = vsub.f32 %v840, %v841
  %v843 = vand.u32 %v842, 4294901760
  %844 = vmatpush1.msra.mxu0 %v843
  %845 = vmatprep.subr.mxu0 0.0
  %v846 = vand.u32 %v647, 4294901760
  %v847 = vsub.f32 %v647, %v846
  %v848 = vand.u32 %v847, 4294901760
  %v849 = vsub.f32 %v847, %v848
  %v850 = vand.u32 %v849, 4294901760
  %851 = vmatpush1.msra.mxu0 %v850
  %852 = vmatprep.subr.mxu0 0.0
  %v853 = vand.u32 %v648, 4294901760
  %v854 = vsub.f32 %v648, %v853
  %v855 = vand.u32 %v854, 4294901760
  %v856 = vsub.f32 %v854, %v855
  %v857 = vand.u32 %v856, 4294901760
  %858 = vmatpush1.msra.mxu0 %v857
  %859 = vmatprep.subr.mxu0 0.0
  %v860 = vand.u32 %v649, 4294901760
  %v861 = vsub.f32 %v649, %v860
  %v862 = vand.u32 %v861, 4294901760
  %v863 = vsub.f32 %v861, %v862
  %v864 = vand.u32 %v863, 4294901760
  %865 = vmatpush1.msra.mxu0 %v864
  %866 = vmatprep.subr.mxu0 0.0
  %v867 = vand.u32 %v650, 4294901760
  %v868 = vsub.f32 %v650, %v867
  %v869 = vand.u32 %v868, 4294901760
  %v870 = vsub.f32 %v868, %v869
  %v871 = vand.u32 %v870, 4294901760
  %872 = vmatpush1.msra.mxu0 %v871
  %873 = vmatprep.subr.mxu0 0.0
  %v874 = vand.u32 %v651, 4294901760
  %v875 = vsub.f32 %v651, %v874
  %v876 = vand.u32 %v875, 4294901760
  %v877 = vsub.f32 %v875, %v876
  %v878 = vand.u32 %v877, 4294901760
  %879 = vmatpush1.msra.mxu0 %v878
  %880 = vmatprep.subr.mxu0 0.0
  %v881 = vand.u32 %v652, 4294901760
  %v882 = vsub.f32 %v652, %v881
  %v883 = vand.u32 %v882, 4294901760
  %v884 = vsub.f32 %v882, %v883
  %v885 = vand.u32 %v884, 4294901760
  %886 = vmatpush1.msra.mxu0 %v885
  %887 = vmatprep.subr.mxu0 0.0
  %v888 = vand.u32 %v653, 4294901760
  %v889 = vsub.f32 %v653, %v888
  %v890 = vand.u32 %v889, 4294901760
  %v891 = vsub.f32 %v889, %v890
  %v892 = vand.u32 %v891, 4294901760
  %893 = vmatpush1.msra.mxu0 %v892
  %894 = vmatprep.subr.mxu0 0.0
  %895 = vmatpush1.msra.mxu0 0.0
  %896 = vmatprep.subr.mxu0 0.0
  %897 = vmatpush1.msra.mxu0 0.0
  %898 = vmatprep.subr.mxu0 0.0
  %899 = vmatpush1.msra.mxu0 0.0
  %900 = vmatprep.subr.mxu0 0.0
  %901 = vmatpush1.msra.mxu0 0.0
  %902 = vmatprep.subr.mxu0 0.0
  %903 = vmatpush1.msra.mxu0 0.0
  %904 = vmatprep.subr.mxu0 0.0
  %905 = vmatpush1.msra.mxu0 0.0
  %906 = vmatprep.subr.mxu0 0.0
  %907 = vmatpush1.msra.mxu0 0.0
  %908 = vmatprep.subr.mxu0 0.0
  %909 = vmatpush1.msra.mxu0 0.0
  %910 = vmatprep.subr.mxu0 0.0
  %911 = vmatpush1.msra.mxu0 0.0
  %912 = vmatprep.subr.mxu0 0.0
  %913 = vmatpush1.msra.mxu0 0.0
  %914 = vmatprep.subr.mxu0 0.0
  %915 = vmatpush1.msra.mxu0 0.0
  %916 = vmatprep.subr.mxu0 0.0
  %917 = vmatpush1.msra.mxu0 0.0
  %918 = vmatprep.subr.mxu0 0.0
  %919 = vmatpush1.msra.mxu0 0.0
  %920 = vmatprep.subr.mxu0 0.0
  %921 = vmatpush1.msra.mxu0 0.0
  %922 = vmatprep.subr.mxu0 0.0
  %923 = vmatpush1.msra.mxu0 0.0
  %924 = vmatprep.subr.mxu0 0.0
  %925 = vmatpush1.msra.mxu0 0.0
  %926 = vmatprep.mubr.f32.mxu0 0.0
  %v927 = vand.u32 %v634, 4294901760
  %928 = vmatmul.mubr.f32.gmra.mrb[0].mxu0 %v927
  %v929 = vpop.f32.mrb[0].mxu0
  %v930 = vadd.f32 %v749, %v929
  %v931 = vpop.f32.mrb[0].mxu0
  %932 = vmatprep.mubr.f32.mxu0 0.0
  %v933 = vand.u32 %v635, 4294901760
  %934 = vmatmul.mubr.f32.gmra.mrb[0].mxu0 %v933
  %v935 = vpop.f32.mrb[0].mxu0
  %v936 = vadd.f32 %v759, %v935
  %v937 = vpop.f32.mrb[0].mxu0
  %938 = vmatprep.mubr.f32.mxu0 0.0
  %v939 = vand.u32 %v636, 4294901760
  %940 = vmatmul.mubr.f32.gmra.mrb[0].mxu0 %v939
  %v941 = vpop.f32.mrb[0].mxu0
  %v942 = vadd.f32 %v769, %v941
  %v943 = vpop.f32.mrb[0].mxu0
  %944 = vmatprep.mubr.f32.mxu0 0.0
  %v945 = vand.u32 %v637, 4294901760
  %946 = vmatmul.mubr.f32.gmra.mrb[0].mxu0 %v945
  %v947 = vpop.f32.mrb[0].mxu0
  %v948 = vadd.f32 %v779, %v947
  %v949 = vpop.f32.mrb[0].mxu0
  %950 = vdwg.mxu0
  %951 = vmatprep.subr.mxu0 0.0
  %v952 = vand.u32 %v638, 4294901760
  %v953 = vsub.f32 %v638, %v952
  %954 = vmatpush1.msra.mxu0 %v953
  %955 = vmatprep.subr.mxu0 0.0
  %v956 = vand.u32 %v639, 4294901760
  %v957 = vsub.f32 %v639, %v956
  %958 = vmatpush1.msra.mxu0 %v957
  %959 = vmatprep.subr.mxu0 0.0
  %v960 = vand.u32 %v640, 4294901760
  %v961 = vsub.f32 %v640, %v960
  %962 = vmatpush1.msra.mxu0 %v961
  %963 = vmatprep.subr.mxu0 0.0
  %v964 = vand.u32 %v641, 4294901760
  %v965 = vsub.f32 %v641, %v964
  %966 = vmatpush1.msra.mxu0 %v965
  %967 = vmatprep.subr.mxu0 0.0
  %v968 = vand.u32 %v642, 4294901760
  %v969 = vsub.f32 %v642, %v968
  %970 = vmatpush1.msra.mxu0 %v969
  %971 = vmatprep.subr.mxu0 0.0
  %v972 = vand.u32 %v643, 4294901760
  %v973 = vsub.f32 %v643, %v972
  %974 = vmatpush1.msra.mxu0 %v973
  %975 = vmatprep.subr.mxu0 0.0
  %v976 = vand.u32 %v644, 4294901760
  %v977 = vsub.f32 %v644, %v976
  %978 = vmatpush1.msra.mxu0 %v977
  %979 = vmatprep.subr.mxu0 0.0
  %v980 = vand.u32 %v645, 4294901760
  %v981 = vsub.f32 %v645, %v980
  %982 = vmatpush1.msra.mxu0 %v981
  %983 = vmatprep.subr.mxu0 0.0
  %v984 = vand.u32 %v646, 4294901760
  %v985 = vsub.f32 %v646, %v984
  %986 = vmatpush1.msra.mxu0 %v985
  %987 = vmatprep.subr.mxu0 0.0
  %v988 = vand.u32 %v647, 4294901760
  %v989 = vsub.f32 %v647, %v988
  %990 = vmatpush1.msra.mxu0 %v989
  %991 = vmatprep.subr.mxu0 0.0
  %v992 = vand.u32 %v648, 4294901760
  %v993 = vsub.f32 %v648, %v992
  %994 = vmatpush1.msra.mxu0 %v993
  %995 = vmatprep.subr.mxu0 0.0
  %v996 = vand.u32 %v649, 4294901760
  %v997 = vsub.f32 %v649, %v996
  %998 = vmatpush1.msra.mxu0 %v997
  %999 = vmatprep.subr.mxu0 0.0
  %v1000 = vand.u32 %v650, 4294901760
  %v1001 = vsub.f32 %v650, %v1000
  %1002 = vmatpush1.msra.mxu0 %v1001
  %1003 = vmatprep.subr.mxu0 0.0
  %v1004 = vand.u32 %v651, 4294901760
  %v1005 = vsub.f32 %v651, %v1004
  %1006 = vmatpush1.msra.mxu0 %v1005
  %1007 = vmatprep.subr.mxu0 0.0
  %v1008 = vand.u32 %v652, 4294901760
  %v1009 = vsub.f32 %v652, %v1008
  %1010 = vmatpush1.msra.mxu0 %v1009
  %1011 = vmatprep.subr.mxu0 0.0
  %v1012 = vand.u32 %v653, 4294901760
  %v1013 = vsub.f32 %v653, %v1012
  %1014 = vmatpush1.msra.mxu0 %v1013
  %1015 = vmatprep.subr.mxu0 0.0
  %1016 = vmatpush1.msra.mxu0 0.0
  %1017 = vmatprep.subr.mxu0 0.0
  %1018 = vmatpush1.msra.mxu0 0.0
  %1019 = vmatprep.subr.mxu0 0.0
  %1020 = vmatpush1.msra.mxu0 0.0
  %1021 = vmatprep.subr.mxu0 0.0
  %1022 = vmatpush1.msra.mxu0 0.0
  %1023 = vmatprep.subr.mxu0 0.0
  %1024 = vmatpush1.msra.mxu0 0.0
  %1025 = vmatprep.subr.mxu0 0.0
  %1026 = vmatpush1.msra.mxu0 0.0
  %1027 = vmatprep.subr.mxu0 0.0
  %1028 = vmatpush1.msra.mxu0 0.0
  %1029 = vmatprep.subr.mxu0 0.0
  %1030 = vmatpush1.msra.mxu0 0.0
  %1031 = vmatprep.subr.mxu0 0.0
  %1032 = vmatpush1.msra.mxu0 0.0
  %1033 = vmatprep.subr.mxu0 0.0
  %1034 = vmatpush1.msra.mxu0 0.0
  %1035 = vmatprep.subr.mxu0 0.0
  %1036 = vmatpush1.msra.mxu0 0.0
  %1037 = vmatprep.subr.mxu0 0.0
  %1038 = vmatpush1.msra.mxu0 0.0
  %1039 = vmatprep.subr.mxu0 0.0
  %1040 = vmatpush1.msra.mxu0 0.0
  %1041 = vmatprep.subr.mxu0 0.0
  %1042 = vmatpush1.msra.mxu0 0.0
  %1043 = vmatprep.subr.mxu0 0.0
  %1044 = vmatpush1.msra.mxu0 0.0
  %1045 = vmatprep.subr.mxu0 0.0
  %1046 = vmatpush1.msra.mxu0 0.0
  %1047 = vmatprep.mubr.f32.mxu0 0.0
  %v1048 = vand.u32 %v634, 4294901760
  %v1049 = vsub.f32 %v634, %v1048
  %1050 = vmatmul.mubr.f32.gmra.mrb[0].mxu0 %v1049
  %v1051 = vpop.f32.mrb[0].mxu0
  %v1052 = vadd.f32 %v930, %v1051
  %v1053 = vpop.f32.mrb[0].mxu0
  %1054 = vmatprep.mubr.f32.mxu0 0.0
  %v1055 = vand.u32 %v635, 4294901760
  %v1056 = vsub.f32 %v635, %v1055
  %1057 = vmatmul.mubr.f32.gmra.mrb[0].mxu0 %v1056
  %v1058 = vpop.f32.mrb[0].mxu0
  %v1059 = vadd.f32 %v936, %v1058
  %v1060 = vpop.f32.mrb[0].mxu0
  %1061 = vmatprep.mubr.f32.mxu0 0.0
  %v1062 = vand.u32 %v636, 4294901760
  %v1063 = vsub.f32 %v636, %v1062
  %1064 = vmatmul.mubr.f32.gmra.mrb[0].mxu0 %v1063
  %v1065 = vpop.f32.mrb[0].mxu0
  %v1066 = vadd.f32 %v942, %v1065
  %v1067 = vpop.f32.mrb[0].mxu0
  %1068 = vmatprep.mubr.f32.mxu0 0.0
  %v1069 = vand.u32 %v637, 4294901760
  %v1070 = vsub.f32 %v637, %v1069
  %1071 = vmatmul.mubr.f32.gmra.mrb[0].mxu0 %v1070
  %v1072 = vpop.f32.mrb[0].mxu0
  %v1073 = vadd.f32 %v948, %v1072
  %v1074 = vpop.f32.mrb[0].mxu0
  %1075 = vdwg.mxu0
  %1076 = vmatprep.subr.mxu0 0.0
  %v1077 = vand.u32 %v638, 4294901760
  %1078 = vmatpush1.msra.mxu0 %v1077
  %1079 = vmatprep.subr.mxu0 0.0
  %v1080 = vand.u32 %v639, 4294901760
  %1081 = vmatpush1.msra.mxu0 %v1080
  %1082 = vmatprep.subr.mxu0 0.0
  %v1083 = vand.u32 %v640, 4294901760
  %1084 = vmatpush1.msra.mxu0 %v1083
  %1085 = vmatprep.subr.mxu0 0.0
  %v1086 = vand.u32 %v641, 4294901760
  %1087 = vmatpush1.msra.mxu0 %v1086
  %1088 = vmatprep.subr.mxu0 0.0
  %v1089 = vand.u32 %v642, 4294901760
  %1090 = vmatpush1.msra.mxu0 %v1089
  %1091 = vmatprep.subr.mxu0 0.0
  %v1092 = vand.u32 %v643, 4294901760
  %1093 = vmatpush1.msra.mxu0 %v1092
  %1094 = vmatprep.subr.mxu0 0.0
  %v1095 = vand.u32 %v644, 4294901760
  %1096 = vmatpush1.msra.mxu0 %v1095
  %1097 = vmatprep.subr.mxu0 0.0
  %v1098 = vand.u32 %v645, 4294901760
  %1099 = vmatpush1.msra.mxu0 %v1098
  %1100 = vmatprep.subr.mxu0 0.0
  %v1101 = vand.u32 %v646, 4294901760
  %1102 = vmatpush1.msra.mxu0 %v1101
  %1103 = vmatprep.subr.mxu0 0.0
  %v1104 = vand.u32 %v647, 4294901760
  %1105 = vmatpush1.msra.mxu0 %v1104
  %1106 = vmatprep.subr.mxu0 0.0
  %v1107 = vand.u32 %v648, 4294901760
  %1108 = vmatpush1.msra.mxu0 %v1107
  %1109 = vmatprep.subr.mxu0 0.0
  %v1110 = vand.u32 %v649, 4294901760
  %1111 = vmatpush1.msra.mxu0 %v1110
  %1112 = vmatprep.subr.mxu0 0.0
  %v1113 = vand.u32 %v650, 4294901760
  %1114 = vmatpush1.msra.mxu0 %v1113
  %1115 = vmatprep.subr.mxu0 0.0
  %v1116 = vand.u32 %v651, 4294901760
  %1117 = vmatpush1.msra.mxu0 %v1116
  %1118 = vmatprep.subr.mxu0 0.0
  %v1119 = vand.u32 %v652, 4294901760
  %1120 = vmatpush1.msra.mxu0 %v1119
  %1121 = vmatprep.subr.mxu0 0.0
  %v1122 = vand.u32 %v653, 4294901760
  %1123 = vmatpush1.msra.mxu0 %v1122
  %1124 = vmatprep.subr.mxu0 0.0
  %1125 = vmatpush1.msra.mxu0 0.0
  %1126 = vmatprep.subr.mxu0 0.0
  %1127 = vmatpush1.msra.mxu0 0.0
  %1128 = vmatprep.subr.mxu0 0.0
  %1129 = vmatpush1.msra.mxu0 0.0
  %1130 = vmatprep.subr.mxu0 0.0
  %1131 = vmatpush1.msra.mxu0 0.0
  %1132 = vmatprep.subr.mxu0 0.0
  %1133 = vmatpush1.msra.mxu0 0.0
  %1134 = vmatprep.subr.mxu0 0.0
  %1135 = vmatpush1.msra.mxu0 0.0
  %1136 = vmatprep.subr.mxu0 0.0
  %1137 = vmatpush1.msra.mxu0 0.0
  %1138 = vmatprep.subr.mxu0 0.0
  %1139 = vmatpush1.msra.mxu0 0.0
  %1140 = vmatprep.subr.mxu0 0.0
  %1141 = vmatpush1.msra.mxu0 0.0
  %1142 = vmatprep.subr.mxu0 0.0
  %1143 = vmatpush1.msra.mxu0 0.0
  %1144 = vmatprep.subr.mxu0 0.0
  %1145 = vmatpush1.msra.mxu0 0.0
  %1146 = vmatprep.subr.mxu0 0.0
  %1147 = vmatpush1.msra.mxu0 0.0
  %1148 = vmatprep.subr.mxu0 0.0
  %1149 = vmatpush1.msra.mxu0 0.0
  %1150 = vmatprep.subr.mxu0 0.0
  %1151 = vmatpush1.msra.mxu0 0.0
  %1152 = vmatprep.subr.mxu0 0.0
  %1153 = vmatpush1.msra.mxu0 0.0
  %1154 = vmatprep.subr.mxu0 0.0
  %1155 = vmatpush1.msra.mxu0 0.0
  %1156 = vmatprep.mubr.f32.mxu0 0.0
  %v1157 = vand.u32 %v634, 4294901760
  %v1158 = vsub.f32 %v634, %v1157
  %v1159 = vand.u32 %v1158, 4294901760
  %1160 = vmatmul.mubr.f32.gmra.mrb[0].mxu0 %v1159
  %v1161 = vpop.f32.mrb[0].mxu0
  %v1162 = vadd.f32 %v1052, %v1161
  %v1163 = vpop.f32.mrb[0].mxu0
  %1164 = vmatprep.mubr.f32.mxu0 0.0
  %v1165 = vand.u32 %v635, 4294901760
  %v1166 = vsub.f32 %v635, %v1165
  %v1167 = vand.u32 %v1166, 4294901760
  %1168 = vmatmul.mubr.f32.gmra.mrb[0].mxu0 %v1167
  %v1169 = vpop.f32.mrb[0].mxu0
  %v1170 = vadd.f32 %v1059, %v1169
  %v1171 = vpop.f32.mrb[0].mxu0
  %1172 = vmatprep.mubr.f32.mxu0 0.0
  %v1173 = vand.u32 %v636, 4294901760
  %v1174 = vsub.f32 %v636, %v1173
  %v1175 = vand.u32 %v1174, 4294901760
  %1176 = vmatmul.mubr.f32.gmra.mrb[0].mxu0 %v1175
  %v1177 = vpop.f32.mrb[0].mxu0
  %v1178 = vadd.f32 %v1066, %v1177
  %v1179 = vpop.f32.mrb[0].mxu0
  %1180 = vmatprep.mubr.f32.mxu0 0.0
  %v1181 = vand.u32 %v637, 4294901760
  %v1182 = vsub.f32 %v637, %v1181
  %v1183 = vand.u32 %v1182, 4294901760
  %1184 = vmatmul.mubr.f32.gmra.mrb[0].mxu0 %v1183
  %v1185 = vpop.f32.mrb[0].mxu0
  %v1186 = vadd.f32 %v1073, %v1185
  %v1187 = vpop.f32.mrb[0].mxu0
  %1188 = vdwg.mxu0
  %1189 = vmatprep.subr.mxu0 0.0
  %v1190 = vand.u32 %v638, 4294901760
  %v1191 = vsub.f32 %v638, %v1190
  %v1192 = vand.u32 %v1191, 4294901760
  %1193 = vmatpush1.msra.mxu0 %v1192
  %1194 = vmatprep.subr.mxu0 0.0
  %v1195 = vand.u32 %v639, 4294901760
  %v1196 = vsub.f32 %v639, %v1195
  %v1197 = vand.u32 %v1196, 4294901760
  %1198 = vmatpush1.msra.mxu0 %v1197
  %1199 = vmatprep.subr.mxu0 0.0
  %v1200 = vand.u32 %v640, 4294901760
  %v1201 = vsub.f32 %v640, %v1200
  %v1202 = vand.u32 %v1201, 4294901760
  %1203 = vmatpush1.msra.mxu0 %v1202
  %1204 = vmatprep.subr.mxu0 0.0
  %v1205 = vand.u32 %v641, 4294901760
  %v1206 = vsub.f32 %v641, %v1205
  %v1207 = vand.u32 %v1206, 4294901760
  %1208 = vmatpush1.msra.mxu0 %v1207
  %1209 = vmatprep.subr.mxu0 0.0
  %v1210 = vand.u32 %v642, 4294901760
  %v1211 = vsub.f32 %v642, %v1210
  %v1212 = vand.u32 %v1211, 4294901760
  %1213 = vmatpush1.msra.mxu0 %v1212
  %1214 = vmatprep.subr.mxu0 0.0
  %v1215 = vand.u32 %v643, 4294901760
  %v1216 = vsub.f32 %v643, %v1215
  %v1217 = vand.u32 %v1216, 4294901760
  %1218 = vmatpush1.msra.mxu0 %v1217
  %1219 = vmatprep.subr.mxu0 0.0
  %v1220 = vand.u32 %v644, 4294901760
  %v1221 = vsub.f32 %v644, %v1220
  %v1222 = vand.u32 %v1221, 4294901760
  %1223 = vmatpush1.msra.mxu0 %v1222
  %1224 = vmatprep.subr.mxu0 0.0
  %v1225 = vand.u32 %v645, 4294901760
  %v1226 = vsub.f32 %v645, %v1225
  %v1227 = vand.u32 %v1226, 4294901760
  %1228 = vmatpush1.msra.mxu0 %v1227
  %1229 = vmatprep.subr.mxu0 0.0
  %v1230 = vand.u32 %v646, 4294901760
  %v1231 = vsub.f32 %v646, %v1230
  %v1232 = vand.u32 %v1231, 4294901760
  %1233 = vmatpush1.msra.mxu0 %v1232
  %1234 = vmatprep.subr.mxu0 0.0
  %v1235 = vand.u32 %v647, 4294901760
  %v1236 = vsub.f32 %v647, %v1235
  %v1237 = vand.u32 %v1236, 4294901760
  %1238 = vmatpush1.msra.mxu0 %v1237
  %1239 = vmatprep.subr.mxu0 0.0
  %v1240 = vand.u32 %v648, 4294901760
  %v1241 = vsub.f32 %v648, %v1240
  %v1242 = vand.u32 %v1241, 4294901760
  %1243 = vmatpush1.msra.mxu0 %v1242
  %1244 = vmatprep.subr.mxu0 0.0
  %v1245 = vand.u32 %v649, 4294901760
  %v1246 = vsub.f32 %v649, %v1245
  %v1247 = vand.u32 %v1246, 4294901760
  %1248 = vmatpush1.msra.mxu0 %v1247
  %1249 = vmatprep.subr.mxu0 0.0
  %v1250 = vand.u32 %v650, 4294901760
  %v1251 = vsub.f32 %v650, %v1250
  %v1252 = vand.u32 %v1251, 4294901760
  %1253 = vmatpush1.msra.mxu0 %v1252
  %1254 = vmatprep.subr.mxu0 0.0
  %v1255 = vand.u32 %v651, 4294901760
  %v1256 = vsub.f32 %v651, %v1255
  %v1257 = vand.u32 %v1256, 4294901760
  %1258 = vmatpush1.msra.mxu0 %v1257
  %1259 = vmatprep.subr.mxu0 0.0
  %v1260 = vand.u32 %v652, 4294901760
  %v1261 = vsub.f32 %v652, %v1260
  %v1262 = vand.u32 %v1261, 4294901760
  %1263 = vmatpush1.msra.mxu0 %v1262
  %1264 = vmatprep.subr.mxu0 0.0
  %v1265 = vand.u32 %v653, 4294901760
  %v1266 = vsub.f32 %v653, %v1265
  %v1267 = vand.u32 %v1266, 4294901760
  %1268 = vmatpush1.msra.mxu0 %v1267
  %1269 = vmatprep.subr.mxu0 0.0
  %1270 = vmatpush1.msra.mxu0 0.0
  %1271 = vmatprep.subr.mxu0 0.0
  %1272 = vmatpush1.msra.mxu0 0.0
  %1273 = vmatprep.subr.mxu0 0.0
  %1274 = vmatpush1.msra.mxu0 0.0
  %1275 = vmatprep.subr.mxu0 0.0
  %1276 = vmatpush1.msra.mxu0 0.0
  %1277 = vmatprep.subr.mxu0 0.0
  %1278 = vmatpush1.msra.mxu0 0.0
  %1279 = vmatprep.subr.mxu0 0.0
  %1280 = vmatpush1.msra.mxu0 0.0
  %1281 = vmatprep.subr.mxu0 0.0
  %1282 = vmatpush1.msra.mxu0 0.0
  %1283 = vmatprep.subr.mxu0 0.0
  %1284 = vmatpush1.msra.mxu0 0.0
  %1285 = vmatprep.subr.mxu0 0.0
  %1286 = vmatpush1.msra.mxu0 0.0
  %1287 = vmatprep.subr.mxu0 0.0
  %1288 = vmatpush1.msra.mxu0 0.0
  %1289 = vmatprep.subr.mxu0 0.0
  %1290 = vmatpush1.msra.mxu0 0.0
  %1291 = vmatprep.subr.mxu0 0.0
  %1292 = vmatpush1.msra.mxu0 0.0
  %1293 = vmatprep.subr.mxu0 0.0
  %1294 = vmatpush1.msra.mxu0 0.0
  %1295 = vmatprep.subr.mxu0 0.0
  %1296 = vmatpush1.msra.mxu0 0.0
  %1297 = vmatprep.subr.mxu0 0.0
  %1298 = vmatpush1.msra.mxu0 0.0
  %1299 = vmatprep.subr.mxu0 0.0
  %1300 = vmatpush1.msra.mxu0 0.0
  %1301 = vmatprep.mubr.f32.mxu0 0.0
  %v1302 = vand.u32 %v634, 4294901760
  %1303 = vmatmul.mubr.f32.gmra.mrb[0].mxu0 %v1302
  %v1304 = vpop.f32.mrb[0].mxu0
  %v1305 = vadd.f32 %v1162, %v1304
  %v1306 = vpop.f32.mrb[0].mxu0
  %1307 = vmatprep.mubr.f32.mxu0 0.0
  %v1308 = vand.u32 %v635, 4294901760
  %1309 = vmatmul.mubr.f32.gmra.mrb[0].mxu0 %v1308
  %v1310 = vpop.f32.mrb[0].mxu0
  %v1311 = vadd.f32 %v1170, %v1310
  %v1312 = vpop.f32.mrb[0].mxu0
  %1313 = vmatprep.mubr.f32.mxu0 0.0
  %v1314 = vand.u32 %v636, 4294901760
  %1315 = vmatmul.mubr.f32.gmra.mrb[0].mxu0 %v1314
  %v1316 = vpop.f32.mrb[0].mxu0
  %v1317 = vadd.f32 %v1178, %v1316
  %v1318 = vpop.f32.mrb[0].mxu0
  %1319 = vmatprep.mubr.f32.mxu0 0.0
  %v1320 = vand.u32 %v637, 4294901760
  %1321 = vmatmul.mubr.f32.gmra.mrb[0].mxu0 %v1320
  %v1322 = vpop.f32.mrb[0].mxu0
  %v1323 = vadd.f32 %v1186, %v1322
  %v1324 = vpop.f32.mrb[0].mxu0
  %1325 = vdwg.mxu0
  %1326 = vmatprep.subr.mxu0 0.0
  %v1327 = vand.u32 %v638, 4294901760
  %1328 = vmatpush1.msra.mxu0 %v1327
  %1329 = vmatprep.subr.mxu0 0.0
  %v1330 = vand.u32 %v639, 4294901760
  %1331 = vmatpush1.msra.mxu0 %v1330
  %1332 = vmatprep.subr.mxu0 0.0
  %v1333 = vand.u32 %v640, 4294901760
  %1334 = vmatpush1.msra.mxu0 %v1333
  %1335 = vmatprep.subr.mxu0 0.0
  %v1336 = vand.u32 %v641, 4294901760
  %1337 = vmatpush1.msra.mxu0 %v1336
  %1338 = vmatprep.subr.mxu0 0.0
  %v1339 = vand.u32 %v642, 4294901760
  %1340 = vmatpush1.msra.mxu0 %v1339
  %1341 = vmatprep.subr.mxu0 0.0
  %v1342 = vand.u32 %v643, 4294901760
  %1343 = vmatpush1.msra.mxu0 %v1342
  %1344 = vmatprep.subr.mxu0 0.0
  %v1345 = vand.u32 %v644, 4294901760
  %1346 = vmatpush1.msra.mxu0 %v1345
  %1347 = vmatprep.subr.mxu0 0.0
  %v1348 = vand.u32 %v645, 4294901760
  %1349 = vmatpush1.msra.mxu0 %v1348
  %1350 = vmatprep.subr.mxu0 0.0
  %v1351 = vand.u32 %v646, 4294901760
  %1352 = vmatpush1.msra.mxu0 %v1351
  %1353 = vmatprep.subr.mxu0 0.0
  %v1354 = vand.u32 %v647, 4294901760
  %1355 = vmatpush1.msra.mxu0 %v1354
  %1356 = vmatprep.subr.mxu0 0.0
  %v1357 = vand.u32 %v648, 4294901760
  %1358 = vmatpush1.msra.mxu0 %v1357
  %1359 = vmatprep.subr.mxu0 0.0
  %v1360 = vand.u32 %v649, 4294901760
  %1361 = vmatpush1.msra.mxu0 %v1360
  %1362 = vmatprep.subr.mxu0 0.0
  %v1363 = vand.u32 %v650, 4294901760
  %1364 = vmatpush1.msra.mxu0 %v1363
  %1365 = vmatprep.subr.mxu0 0.0
  %v1366 = vand.u32 %v651, 4294901760
  %1367 = vmatpush1.msra.mxu0 %v1366
  %1368 = vmatprep.subr.mxu0 0.0
  %v1369 = vand.u32 %v652, 4294901760
  %1370 = vmatpush1.msra.mxu0 %v1369
  %1371 = vmatprep.subr.mxu0 0.0
  %v1372 = vand.u32 %v653, 4294901760
  %1373 = vmatpush1.msra.mxu0 %v1372
  %1374 = vmatprep.subr.mxu0 0.0
  %1375 = vmatpush1.msra.mxu0 0.0
  %1376 = vmatprep.subr.mxu0 0.0
  %1377 = vmatpush1.msra.mxu0 0.0
  %1378 = vmatprep.subr.mxu0 0.0
  %1379 = vmatpush1.msra.mxu0 0.0
  %1380 = vmatprep.subr.mxu0 0.0
  %1381 = vmatpush1.msra.mxu0 0.0
  %1382 = vmatprep.subr.mxu0 0.0
  %1383 = vmatpush1.msra.mxu0 0.0
  %1384 = vmatprep.subr.mxu0 0.0
  %1385 = vmatpush1.msra.mxu0 0.0
  %1386 = vmatprep.subr.mxu0 0.0
  %1387 = vmatpush1.msra.mxu0 0.0
  %1388 = vmatprep.subr.mxu0 0.0
  %1389 = vmatpush1.msra.mxu0 0.0
  %1390 = vmatprep.subr.mxu0 0.0
  %1391 = vmatpush1.msra.mxu0 0.0
  %1392 = vmatprep.subr.mxu0 0.0
  %1393 = vmatpush1.msra.mxu0 0.0
  %1394 = vmatprep.subr.mxu0 0.0
  %1395 = vmatpush1.msra.mxu0 0.0
  %1396 = vmatprep.subr.mxu0 0.0
  %1397 = vmatpush1.msra.mxu0 0.0
  %1398 = vmatprep.subr.mxu0 0.0
  %1399 = vmatpush1.msra.mxu0 0.0
  %1400 = vmatprep.subr.mxu0 0.0
  %1401 = vmatpush1.msra.mxu0 0.0
  %1402 = vmatprep.subr.mxu0 0.0
  %1403 = vmatpush1.msra.mxu0 0.0
  %1404 = vmatprep.subr.mxu0 0.0
  %1405 = vmatpush1.msra.mxu0 0.0
  %1406 = vmatprep.mubr.f32.mxu0 0.0
  %v1407 = vand.u32 %v634, 4294901760
  %1408 = vmatmul.mubr.f32.gmra.mrb[0].mxu0 %v1407
  %v1409 = vpop.f32.mrb[0].mxu0
  %v1410 = vadd.f32 %v1305, %v1409
  %v1411 = vpop.f32.mrb[0].mxu0
  %1412 = vmatprep.mubr.f32.mxu0 0.0
  %v1413 = vand.u32 %v635, 4294901760
  %1414 = vmatmul.mubr.f32.gmra.mrb[0].mxu0 %v1413
  %v1415 = vpop.f32.mrb[0].mxu0
  %v1416 = vadd.f32 %v1311, %v1415
  %v1417 = vpop.f32.mrb[0].mxu0
  %1418 = vmatprep.mubr.f32.mxu0 0.0
  %v1419 = vand.u32 %v636, 4294901760
  %1420 = vmatmul.mubr.f32.gmra.mrb[0].mxu0 %v1419
  %v1421 = vpop.f32.mrb[0].mxu0
  %v1422 = vadd.f32 %v1317, %v1421
  %v1423 = vpop.f32.mrb[0].mxu0
  %1424 = vmatprep.mubr.f32.mxu0 0.0
  %v1425 = vand.u32 %v637, 4294901760
  %1426 = vmatmul.mubr.f32.gmra.mrb[0].mxu0 %v1425
  %v1427 = vpop.f32.mrb[0].mxu0
  %v1428 = vadd.f32 %v1323, %v1427
  %v1429 = vpop.f32.mrb[0].mxu0
  %1430 = vdwg.mxu0
  %vm1431 = vcmask 64512
  %v1432 = vsel %vm1431, %v1410, -inf
  %1433 = vmax.xlane.f32.xlu0 %v1432
  %v1434 = vpop.xlane.xlu0 %1433
  %v1435 = vsel %vm1431, %v1416, -inf
  %1436 = vmax.xlane.f32.xlu0 %v1435
  %v1437 = vpop.xlane.xlu0 %1436
  %v1438 = vsel %vm1431, %v1422, -inf
  %1439 = vmax.xlane.f32.xlu0 %v1438
  %v1440 = vpop.xlane.xlu0 %1439
  %v1441 = vsel %vm1431, %v1428, -inf
  %1442 = vmax.xlane.f32.xlu0 %v1441
  %v1443 = vpop.xlane.xlu0 %1442
  %v1444 = vsub.f32 %v1410, %v1434
  %v1445 = vsub.f32 %v1416, %v1437
  %v1446 = vsub.f32 %v1422, %v1440
  %v1447 = vsub.f32 %v1428, %v1443
  %v1448 = vmul.f32 %v1444, 1.442695
  %v1449 = vpow.pop %v1448
  %v1450 = vmul.f32 %v1445, 1.442695
  %v1451 = vpow.pop %v1450
  %v1452 = vmul.f32 %v1446, 1.442695
  %v1453 = vpow.pop %v1452
  %v1454 = vmul.f32 %v1447, 1.442695
  %v1455 = vpow.pop %v1454
  %v1456 = vsel %vm1431, %v1449, 0.0
  %1457 = vadd.xlane.f32.xlu0 %v1456
  %v1458 = vpop.xlane.xlu0 %1457
  %v1459 = vsel %vm1431, %v1451, 0.0
  %1460 = vadd.xlane.f32.xlu0 %v1459
  %v1461 = vpop.xlane.xlu0 %1460
  %v1462 = vsel %vm1431, %v1453, 0.0
  %1463 = vadd.xlane.f32.xlu0 %v1462
  %v1464 = vpop.xlane.xlu0 %1463
  %v1465 = vsel %vm1431, %v1455, 0.0
  %1466 = vadd.xlane.f32.xlu0 %v1465
  %v1467 = vpop.xlane.xlu0 %1466
  %v1468 = vrcp.pop %v1458
  %v1469 = vmul.f32 %v1449, %v1468
  %v1470 = vrcp.pop %v1461
  %v1471 = vmul.f32 %v1451, %v1470
  %v1472 = vrcp.pop %v1464
  %v1473 = vmul.f32 %v1453, %v1472
  %v1474 = vrcp.pop %v1467
  %v1475 = vmul.f32 %v1455, %v1474
  %1476 = vst.msk [vmem:[%s5] sm:$0xff] %vm1431, %v1469
  %1477 = vst.msk [vmem:[%s5 + $0x8] sm:$0xff] %vm1431, %v1471
  %1478 = vst.msk [vmem:[%s5 + $0x10] sm:$0xff] %vm1431, %v1473
  %1479 = vst.msk [vmem:[%s5 + $0x18] sm:$0xff] %vm1431, %v1475
  // Predicated region
  $region22: #{tpu_custom_call.1} parent=0 // pred_check
    _
  $region23: #{tpu_custom_call.1} parent=0 // pred_check_branch
    %1481 = sbr.rel (0) target = $region25
  $region24: #{tpu_custom_call.1} parent=0 // pred_region
    _
  $region25: #{tpu_custom_call.1} parent=0 // pred_fallthru
    _
  // Predicated region
  $region26: #{tpu_custom_call.1} parent=0 // pred_check
    _
  $region27: #{tpu_custom_call.1} parent=0 // pred_check_branch
    %1483 = sbr.rel (0) target = $region29
  $region28: #{tpu_custom_call.1} parent=0 // pred_region
    _
  $region29: #{tpu_custom_call.1} parent=0 // pred_fallthru
    _

</llo_original>
